<compile_context>
chip_gen: v6e
topology: v6e:2x2x1
jax: 0.10.0
libtpu: 0.0.40
codegen_flags: <defaults>
</compile_context>

<pallas_src>
import functools

import numpy as np
import jax
import jax.numpy as jnp
from jax.experimental import pallas as pl
from jax.experimental.pallas import tpu as pltpu

INPUT_SIZE = 114        # size of each half of the 228-dim feature vector
HIDDEN = 32
LANES = 128             # vreg lane width == 4*HIDDEN (one gate slab)


def _round_up(n, m):
    return (n + m - 1) // m * m


# ----------------------------------------------------------------------------
# Packed weight slab layout (static row offsets into a (R, 128) f32 array)
# ----------------------------------------------------------------------------
def _slab_layout(bs, fr):
    assert bs * fr <= LANES, "permutation matrices need bs*fr <= 128 lanes"
    rp = _round_up(2 * bs, 8)           # chain rows per timestep, padded to a full sublane tile
    lay = {}
    r = 0

    def _add(name, rows):
        nonlocal r
        lay[name] = r
        r += rows

    _add("w1", 2 * INPUT_SIZE)   # block-diag fc1 weight (228 rows, lanes 0:64 used)
    _add("b1", 1)                # duplicated fc1 bias (lanes 0:64)
    _add("wihA", LANES)          # (128,128): rows 0:32  = W_ih (A-stream input proj)
    _add("wihB", LANES)          # (128,128): rows 32:64 = W_ih (B-stream input proj)
    _add("pA", fr * rp)          # 0/1 permutation: (b,t)-major rows -> time-major chain rows
    _add("pB", fr * rp)
    _add("blstm", 1)             # bias_ih + bias_hh
    _add("whh", HIDDEN)          # (32,128)
    _add("w3", HIDDEN)           # fc3 weight, lanes 0:2
    _add("b3", 1)
    _add("w4a", HIDDEN)          # fc4 weight rows 0:32  (hA half), lanes 0:2
    _add("w4b", HIDDEN)          # fc4 weight rows 32:64 (hB half), lanes 0:2
    _add("b4", 1)
    return lay, _round_up(r, 8), rp


def pack_params(params, bs, fr):
    """Pack all weights/biases into one (R,128) f32 slab (built once at init)."""
    lay, rows, rp = _slab_layout(bs, fr)
    H, F = HIDDEN, INPUT_SIZE
    slab = np.zeros((rows, LANES), np.float32)

    w1 = np.asarray(params["w1"], np.float32)      # (114, 32)
    b1 = np.asarray(params["b1"], np.float32)
    w_ih = np.asarray(params["w_ih"], np.float32)  # (32, 128)
    w_hh = np.asarray(params["w_hh"], np.float32)  # (32, 128)
    b_l = np.asarray(params["b_lstm"], np.float32)
    w3 = np.asarray(params["w3"], np.float32)      # (32, 2)
    b3 = np.asarray(params["b3"], np.float32)
    w4 = np.asarray(params["w4"], np.float32)      # (64, 2)
    b4 = np.asarray(params["b4"], np.float32)

    # fc1 as a block-diagonal (228 x [64]) weight: A features -> lanes 0:32,
    # B features -> lanes 32:64 (this also removes the unaligned 114-lane split).
    slab[lay["w1"]:lay["w1"] + F, 0:H] = w1
    slab[lay["w1"] + F:lay["w1"] + 2 * F, H:2 * H] = w1
    slab[lay["b1"], 0:H] = b1
    slab[lay["b1"], H:2 * H] = b1

    # LSTM input projections that pick the A / B lane-halves of the fc1 output.
    slab[lay["wihA"]:lay["wihA"] + H, :] = w_ih
    slab[lay["wihB"] + H:lay["wihB"] + 2 * H, :] = w_ih

    # 0/1 permutation matrices: place pre-gate row (b*fr + t) at time-major row
    # (rp*t + chain); chains per step = [A_b0..A_b{bs-1}, B_b0..B_b{bs-1}, pad..].
    for t in range(fr):
        for b in range(bs):
            slab[lay["pA"] + rp * t + b, b * fr + t] = 1.0
            slab[lay["pB"] + rp * t + bs + b, b * fr + t] = 1.0

    slab[lay["blstm"], :] = b_l
    slab[lay["whh"]:lay["whh"] + H, :] = w_hh
    # Head weights lane-padded to 128 so their results land directly in the
    # merged 128-lane output tile (no lane concat/pad in the epilogue).
    slab[lay["w3"]:lay["w3"] + H, 0:2] = w3
    slab[lay["b3"], 0:2] = b3
    slab[lay["w4a"]:lay["w4a"] + H, 0:2] = w4[:H]
    slab[lay["w4b"]:lay["w4b"] + H, 0:2] = w4[H:]
    slab[lay["b4"], 0:2] = b4
    return jnp.asarray(slab)


# ----------------------------------------------------------------------------
# Fused Pallas kernel: fc1+ReLU -> LSTM (zero init state) -> fc3/fc4 heads
# ----------------------------------------------------------------------------
def _fused_kernel(x_ref, w_ref, out_ref, *, bs, fr, rp, lay, out_rows):
    H = HIDDEN
    f32 = jnp.float32
    dot = functools.partial(jnp.dot, preferred_element_type=f32)

    # ---- fc1 (+ReLU) for both streams at once via the block-diag weight ------
    x_flat = x_ref[...].reshape(bs * fr, 2 * INPUT_SIZE)          # row = b*fr + t
    w1 = w_ref[pl.ds(lay["w1"], 2 * INPUT_SIZE), :]               # (228, 128)
    b1 = w_ref[pl.ds(lay["b1"], 1), :]                            # (1, 128)
    h1 = jnp.maximum(dot(x_flat, w1) + b1, 0.0)                   # (bs*fr, 128): lanes 0:32 A, 32:64 B, rest 0
    # (dropout = identity in this deterministic / eval forward)

    # ---- hoisted LSTM input projection + time-major regrouping ---------------
    # tA/tB row (b*fr + t) = input-part pre-gates of chain (A,b)/(B,b) at time t.
    tA = dot(h1, w_ref[pl.ds(lay["wihA"], LANES), :])             # (bs*fr, 128)
    tB = dot(h1, w_ref[pl.ds(lay["wihB"], LANES), :])             # (bs*fr, 128)
    # Regroup into time-major, sublane-aligned step tiles with 0/1 permutation
    # matmuls (MXU-only, exact row selection, no XLU transposes/gathers).
    pA = w_ref[pl.ds(lay["pA"], fr * rp), :][:, 0:bs * fr]        # (fr*rp, bs*fr)
    pB = w_ref[pl.ds(lay["pB"], fr * rp), :][:, 0:bs * fr]
    bl = w_ref[pl.ds(lay["blstm"], 1), :]                         # (1, 128)
    pre = dot(pA, tA) + dot(pB, tB) + bl                          # (fr*rp, 128); rows [t*rp, (t+1)*rp) = step t

    # ---- recurrence: only h @ W_hh + elementwise math on the serial path -----
    # TODO(synk): W_hh is loop-invariant; if the Mosaic dump shows a per-step RHS
    #             push, switch to pltpu.matmul_push_rhs/_acc_lhs/_pop (result path
    #             differs per generation: MRF on v5e/v6e, MRB on v7x).
    whh = w_ref[pl.ds(lay["whh"], H), :]                          # (32, 128)
    h = jnp.zeros((rp, H), f32)
    c = jnp.zeros((rp, H), f32)
    for t in range(fr):                       # static unroll; fr is small
        g = pre[t * rp:(t + 1) * rp, :] + dot(h, whh)             # one aligned (rp,128) tile
        sig = jax.nn.sigmoid(g)               # whole-slab transcendentals (EUP)
        tnh = jnp.tanh(g)
        i_g = sig[:, 0 * H:1 * H]
        f_g = sig[:, 1 * H:2 * H]
        g_g = tnh[:, 2 * H:3 * H]
        o_g = sig[:, 3 * H:4 * H]
        c = f_g * c + i_g * g_g
        h = o_g * jnp.tanh(c)

    # ---- heads: fc3 on stacked A/B rows, fc4 as two split matmuls ------------
    # h rows: 0..bs-1 = hA (per batch), bs..2bs-1 = hB, rest = padding chains.
    yab = dot(h[0:2 * bs, :], w_ref[pl.ds(lay["w3"], H), :]) \
        + w_ref[pl.ds(lay["b3"], 1), :]                           # (2bs,128): rows 0..bs-1 yA, bs..2bs-1 yB
    yy = dot(h[0:bs, :], w_ref[pl.ds(lay["w4a"], H), :]) \
        + dot(h[bs:2 * bs, :], w_ref[pl.ds(lay["w4b"], H), :]) \
        + w_ref[pl.ds(lay["b4"], 1), :]                           # (bs, 128)

    pieces = [yab, yy]
    pad = out_rows - 3 * bs
    if pad:
        pieces.append(jnp.zeros((pad, LANES), f32))
    # Single merged, lane-dense output tile -> one unmasked full-tile store / DMA.
    out_ref[...] = jnp.concatenate(pieces, axis=0).astype(out_ref.dtype)


# ----------------------------------------------------------------------------
# Model wrapper (no input-side host-graph plumbing; only 3 tiny output slices)
# ----------------------------------------------------------------------------
def init_params(key):
    ks = jax.random.split(key, 8)
    scale = 0.05
    return {
        # fc1: Linear(114 -> 32) (transposed: (in, out))
        "w1": scale * jax.random.normal(ks[0], (INPUT_SIZE, HIDDEN), jnp.float32),
        "b1": scale * jax.random.normal(ks[1], (HIDDEN,), jnp.float32),
        # lstm: input 32, hidden 32 — transposed weights (H, 4H); gate order i,f,g,o
        "w_ih": scale * jax.random.normal(ks[2], (HIDDEN, 4 * HIDDEN), jnp.float32),
        "w_hh": scale * jax.random.normal(ks[3], (HIDDEN, 4 * HIDDEN), jnp.float32),
        # b_lstm == bias_ih + bias_hh of the PyTorch LSTM
        "b_lstm": scale * jax.random.normal(ks[4], (4 * HIDDEN,), jnp.float32),
        # fc3: Linear(32 -> 2)
        "w3": scale * jax.random.normal(ks[5], (HIDDEN, 2), jnp.float32),
        "b3": scale * jax.random.normal(ks[6], (2,), jnp.float32),
        # fc4: Linear(64 -> 2)
        "w4": scale * jax.random.normal(ks[7], (2 * HIDDEN, 2), jnp.float32),
        "b4": jnp.zeros((2,), jnp.float32),
    }


@jax.jit
def u_t_train_forward(w_slab, x):
    # x: (B, T, 228) f32 ; w_slab: packed weight slab from pack_params().
    bs, fr, feat = x.shape
    assert feat == 2 * INPUT_SIZE
    lay, rows, rp = _slab_layout(bs, fr)
    assert w_slab.shape == (rows, LANES), "w_slab was packed for a different (bs, fr)"
    out_rows = _round_up(3 * bs, 8)

    m = bs * fr
    flops = 2 * (m * 2 * INPUT_SIZE * LANES          # fc1
                 + 2 * m * LANES * LANES             # wihA / wihB projections
                 + 2 * (fr * rp) * m * LANES         # permutation matmuls
                 + fr * rp * HIDDEN * LANES          # recurrence h @ W_hh
                 + 4 * bs * HIDDEN * LANES)          # heads
    cost = pl.CostEstimate(
        flops=flops,
        transcendentals=fr * rp * (2 * 4 * HIDDEN + HIDDEN),
        bytes_accessed=(x.size + w_slab.size + out_rows * LANES) * 4,
    )

    kern = functools.partial(_fused_kernel, bs=bs, fr=fr, rp=rp, lay=lay,
                             out_rows=out_rows)
    out = pl.pallas_call(
        kern,
        out_shape=jax.ShapeDtypeStruct((out_rows, LANES), jnp.float32),
        in_specs=[pl.BlockSpec(memory_space=pltpu.MemorySpace.VMEM),     # x (full block)
                  pl.BlockSpec(memory_space=pltpu.MemorySpace.VMEM)],    # packed weights
        out_specs=pl.BlockSpec(memory_space=pltpu.MemorySpace.VMEM),
        cost_estimate=cost,
    )(x, w_slab)

    # Only remaining host-graph work: three trivial static slices of one tile.
    yA = out[0:bs, 0:2]
    yB = out[bs:2 * bs, 0:2]
    y = out[2 * bs:3 * bs, 0:2]
    return yA, yB, y


# ----------------------------------------------------------------------------
# Pure-JAX reference (correctness sanity check)
# ----------------------------------------------------------------------------
def reference_forward(params, x):
    bs, fr, _ = x.shape

    def stream(xs):                                              # (B, T, 114)
        h1 = jnp.maximum(
            xs.reshape(bs * fr, INPUT_SIZE) @ params["w1"] + params["b1"], 0.0)
        h1 = h1.reshape(bs, fr, HIDDEN)

        def step(carry, xt):
            h, c = carry
            g = xt @ params["w_ih"] + h @ params["w_hh"] + params["b_lstm"]
            i = jax.nn.sigmoid(g[:, :HIDDEN])
            f = jax.nn.sigmoid(g[:, HIDDEN:2 * HIDDEN])
            gg = jnp.tanh(g[:, 2 * HIDDEN:3 * HIDDEN])
            o = jax.nn.sigmoid(g[:, 3 * HIDDEN:])
            c = f * c + i * gg
            h = o * jnp.tanh(c)
            return (h, c), None

        init = (jnp.zeros((bs, HIDDEN), jnp.float32),
                jnp.zeros((bs, HIDDEN), jnp.float32))
        (h_last, _), _ = jax.lax.scan(step, init, jnp.transpose(h1, (1, 0, 2)))
        return h_last

    hA = stream(x[:, :, :INPUT_SIZE])
    hB = stream(x[:, :, INPUT_SIZE:])
    yA = hA @ params["w3"] + params["b3"]
    yB = hB @ params["w3"] + params["b3"]
    y = jnp.concatenate([hA, hB], axis=-1) @ params["w4"] + params["b4"]
    return yA, yB, y


if __name__ == "__main__":
    key = jax.random.PRNGKey(0)
    pkey, xkey = jax.random.split(key)
    params = init_params(pkey)

    bs, fr = 2, 8
    w_slab = pack_params(params, bs, fr)          # packed once, outside jit
    x = jax.random.normal(xkey, (bs, fr, 2 * INPUT_SIZE), jnp.float32)

    yA, yB, y = u_t_train_forward(w_slab, x)
    jax.block_until_ready((yA, yB, y))

    assert yA.shape == (bs, 2) and yB.shape == (bs, 2) and y.shape == (bs, 2)

    rA, rB, ry = reference_forward(params, x)
    # 2e-3 tolerance: allows for MXU default-precision rounding vs the XLA reference.
    assert jnp.allclose(yA, rA, atol=2e-3, rtol=2e-3)
    assert jnp.allclose(yB, rB, atol=2e-3, rtol=2e-3)
    assert jnp.allclose(y, ry, atol=2e-3, rtol=2e-3)

    print("KERNEL_OK")
</pallas_src>

<mosaic_0001>
module attributes {stable_mosaic.version = 11 : i64} {
  func.func @_fused_kernel(%arg0: memref<2x8x228xf32, #tpu.memory_space<vmem>>, %arg1: memref<744x128xf32, #tpu.memory_space<vmem>>, %arg2: memref<8x128xf32, #tpu.memory_space<vmem>>) attributes {dimension_semantics = [], scalar_prefetch = 0 : i64, scratch_operands = 0 : i64, tpu.core_type = #tpu.core_type<tc>} {
    %c0 = arith.constant 0 : index
    %c0_0 = arith.constant 0 : index
    %c0_1 = arith.constant 0 : index
    %0 = vector.load %arg0[%c0, %c0_0, %c0_1] : memref<2x8x228xf32, #tpu.memory_space<vmem>>, vector<2x8x228xf32>
    %1 = vector.shape_cast %0 : vector<2x8x228xf32> to vector<16x228xf32>
    %c0_2 = arith.constant 0 : index
    %c0_3 = arith.constant 0 : index
    %2 = vector.load %arg1[%c0_2, %c0_3] : memref<744x128xf32, #tpu.memory_space<vmem>>, vector<228x128xf32>
    %c228 = arith.constant 228 : index
    %c0_4 = arith.constant 0 : index
    %3 = vector.load %arg1[%c228, %c0_4] : memref<744x128xf32, #tpu.memory_space<vmem>>, vector<1x128xf32>
    %cst = arith.constant dense<0.000000e+00> : vector<16x128xf32>
    %4 = tpu.matmul %1, %2, %cst {dimension_numbers = #tpu.dot_dimension_numbers<[1], [0], [0], [1], [0, 0, 1, 1], [], []>} : vector<16x228xf32>, vector<228x128xf32>, vector<16x128xf32> -> vector<16x128xf32>
    %5 = vector.broadcast %3 : vector<1x128xf32> to vector<16x128xf32>
    %6 = arith.addf %4, %5 : vector<16x128xf32>
    %cst_5 = arith.constant 0.000000e+00 : f32
    %7 = vector.broadcast %cst_5 : f32 to vector<16x128xf32>
    %8 = arith.maximumf %6, %7 : vector<16x128xf32>
    %c229 = arith.constant 229 : index
    %c0_6 = arith.constant 0 : index
    %9 = vector.load %arg1[%c229, %c0_6] : memref<744x128xf32, #tpu.memory_space<vmem>>, vector<128x128xf32>
    %cst_7 = arith.constant dense<0.000000e+00> : vector<16x128xf32>
    %10 = tpu.matmul %8, %9, %cst_7 {dimension_numbers = #tpu.dot_dimension_numbers<[1], [0], [0], [1], [0, 0, 1, 1], [], []>} : vector<16x128xf32>, vector<128x128xf32>, vector<16x128xf32> -> vector<16x128xf32>
    %c357 = arith.constant 357 : index
    %c0_8 = arith.constant 0 : index
    %11 = vector.load %arg1[%c357, %c0_8] : memref<744x128xf32, #tpu.memory_space<vmem>>, vector<128x128xf32>
    %cst_9 = arith.constant dense<0.000000e+00> : vector<16x128xf32>
    %12 = tpu.matmul %8, %11, %cst_9 {dimension_numbers = #tpu.dot_dimension_numbers<[1], [0], [0], [1], [0, 0, 1, 1], [], []>} : vector<16x128xf32>, vector<128x128xf32>, vector<16x128xf32> -> vector<16x128xf32>
    %c485 = arith.constant 485 : index
    %c0_10 = arith.constant 0 : index
    %13 = vector.load %arg1[%c485, %c0_10] : memref<744x128xf32, #tpu.memory_space<vmem>>, vector<64x128xf32>
    %14 = vector.extract_strided_slice %13 {offsets = [0, 0], sizes = [64, 16], strides = [1, 1]} : vector<64x128xf32> to vector<64x16xf32>
    %c549 = arith.constant 549 : index
    %c0_11 = arith.constant 0 : index
    %15 = vector.load %arg1[%c549, %c0_11] : memref<744x128xf32, #tpu.memory_space<vmem>>, vector<64x128xf32>
    %16 = vector.extract_strided_slice %15 {offsets = [0, 0], sizes = [64, 16], strides = [1, 1]} : vector<64x128xf32> to vector<64x16xf32>
    %c613 = arith.constant 613 : index
    %c0_12 = arith.constant 0 : index
    %17 = vector.load %arg1[%c613, %c0_12] : memref<744x128xf32, #tpu.memory_space<vmem>>, vector<1x128xf32>
    %cst_13 = arith.constant dense<0.000000e+00> : vector<64x128xf32>
    %18 = tpu.matmul %14, %10, %cst_13 {dimension_numbers = #tpu.dot_dimension_numbers<[1], [0], [0], [1], [0, 0, 1, 1], [], []>} : vector<64x16xf32>, vector<16x128xf32>, vector<64x128xf32> -> vector<64x128xf32>
    %cst_14 = arith.constant dense<0.000000e+00> : vector<64x128xf32>
    %19 = tpu.matmul %16, %12, %cst_14 {dimension_numbers = #tpu.dot_dimension_numbers<[1], [0], [0], [1], [0, 0, 1, 1], [], []>} : vector<64x16xf32>, vector<16x128xf32>, vector<64x128xf32> -> vector<64x128xf32>
    %20 = arith.addf %18, %19 : vector<64x128xf32>
    %21 = vector.broadcast %17 : vector<1x128xf32> to vector<64x128xf32>
    %22 = arith.addf %20, %21 : vector<64x128xf32>
    %c614 = arith.constant 614 : index
    %c0_15 = arith.constant 0 : index
    %23 = vector.load %arg1[%c614, %c0_15] : memref<744x128xf32, #tpu.memory_space<vmem>>, vector<32x128xf32>
    %cst_16 = arith.constant 0.000000e+00 : f32
    %24 = vector.broadcast %cst_16 : f32 to vector<8x32xf32>
    %cst_17 = arith.constant 0.000000e+00 : f32
    %25 = vector.broadcast %cst_17 : f32 to vector<8x32xf32>
    %26 = vector.extract_strided_slice %22 {offsets = [0, 0], sizes = [8, 128], strides = [1, 1]} : vector<64x128xf32> to vector<8x128xf32>
    %cst_18 = arith.constant dense<0.000000e+00> : vector<8x128xf32>
    %27 = tpu.matmul %24, %23, %cst_18 {dimension_numbers = #tpu.dot_dimension_numbers<[1], [0], [0], [1], [0, 0, 1, 1], [], []>} : vector<8x32xf32>, vector<32x128xf32>, vector<8x128xf32> -> vector<8x128xf32>
    %28 = arith.addf %26, %27 : vector<8x128xf32>
    %29 = arith.negf %28 : vector<8x128xf32>
    %30 = math.exp %29 : vector<8x128xf32>
    %cst_19 = arith.constant 1.000000e+00 : f32
    %31 = vector.broadcast %cst_19 : f32 to vector<8x128xf32>
    %32 = arith.addf %31, %30 : vector<8x128xf32>
    %33 = arith.divf %31, %32 : vector<8x128xf32>
    %34 = math.tanh %28 : vector<8x128xf32>
    %35 = vector.extract_strided_slice %33 {offsets = [0, 0], sizes = [8, 32], strides = [1, 1]} : vector<8x128xf32> to vector<8x32xf32>
    %36 = vector.extract_strided_slice %33 {offsets = [0, 32], sizes = [8, 32], strides = [1, 1]} : vector<8x128xf32> to vector<8x32xf32>
    %37 = vector.extract_strided_slice %34 {offsets = [0, 64], sizes = [8, 32], strides = [1, 1]} : vector<8x128xf32> to vector<8x32xf32>
    %38 = vector.extract_strided_slice %33 {offsets = [0, 96], sizes = [8, 32], strides = [1, 1]} : vector<8x128xf32> to vector<8x32xf32>
    %39 = arith.mulf %36, %25 : vector<8x32xf32>
    %40 = arith.mulf %35, %37 : vector<8x32xf32>
    %41 = arith.addf %39, %40 : vector<8x32xf32>
    %42 = math.tanh %41 : vector<8x32xf32>
    %43 = arith.mulf %38, %42 : vector<8x32xf32>
    %44 = vector.extract_strided_slice %22 {offsets = [8, 0], sizes = [8, 128], strides = [1, 1]} : vector<64x128xf32> to vector<8x128xf32>
    %cst_20 = arith.constant dense<0.000000e+00> : vector<8x128xf32>
    %45 = tpu.matmul %43, %23, %cst_20 {dimension_numbers = #tpu.dot_dimension_numbers<[1], [0], [0], [1], [0, 0, 1, 1], [], []>} : vector<8x32xf32>, vector<32x128xf32>, vector<8x128xf32> -> vector<8x128xf32>
    %46 = arith.addf %44, %45 : vector<8x128xf32>
    %47 = arith.negf %46 : vector<8x128xf32>
    %48 = math.exp %47 : vector<8x128xf32>
    %cst_21 = arith.constant 1.000000e+00 : f32
    %49 = vector.broadcast %cst_21 : f32 to vector<8x128xf32>
    %50 = arith.addf %49, %48 : vector<8x128xf32>
    %51 = arith.divf %49, %50 : vector<8x128xf32>
    %52 = math.tanh %46 : vector<8x128xf32>
    %53 = vector.extract_strided_slice %51 {offsets = [0, 0], sizes = [8, 32], strides = [1, 1]} : vector<8x128xf32> to vector<8x32xf32>
    %54 = vector.extract_strided_slice %51 {offsets = [0, 32], sizes = [8, 32], strides = [1, 1]} : vector<8x128xf32> to vector<8x32xf32>
    %55 = vector.extract_strided_slice %52 {offsets = [0, 64], sizes = [8, 32], strides = [1, 1]} : vector<8x128xf32> to vector<8x32xf32>
    %56 = vector.extract_strided_slice %51 {offsets = [0, 96], sizes = [8, 32], strides = [1, 1]} : vector<8x128xf32> to vector<8x32xf32>
    %57 = arith.mulf %54, %41 : vector<8x32xf32>
    %58 = arith.mulf %53, %55 : vector<8x32xf32>
    %59 = arith.addf %57, %58 : vector<8x32xf32>
    %60 = math.tanh %59 : vector<8x32xf32>
    %61 = arith.mulf %56, %60 : vector<8x32xf32>
    %62 = vector.extract_strided_slice %22 {offsets = [16, 0], sizes = [8, 128], strides = [1, 1]} : vector<64x128xf32> to vector<8x128xf32>
    %cst_22 = arith.constant dense<0.000000e+00> : vector<8x128xf32>
    %63 = tpu.matmul %61, %23, %cst_22 {dimension_numbers = #tpu.dot_dimension_numbers<[1], [0], [0], [1], [0, 0, 1, 1], [], []>} : vector<8x32xf32>, vector<32x128xf32>, vector<8x128xf32> -> vector<8x128xf32>
    %64 = arith.addf %62, %63 : vector<8x128xf32>
    %65 = arith.negf %64 : vector<8x128xf32>
    %66 = math.exp %65 : vector<8x128xf32>
    %cst_23 = arith.constant 1.000000e+00 : f32
    %67 = vector.broadcast %cst_23 : f32 to vector<8x128xf32>
    %68 = arith.addf %67, %66 : vector<8x128xf32>
    %69 = arith.divf %67, %68 : vector<8x128xf32>
    %70 = math.tanh %64 : vector<8x128xf32>
    %71 = vector.extract_strided_slice %69 {offsets = [0, 0], sizes = [8, 32], strides = [1, 1]} : vector<8x128xf32> to vector<8x32xf32>
    %72 = vector.extract_strided_slice %69 {offsets = [0, 32], sizes = [8, 32], strides = [1, 1]} : vector<8x128xf32> to vector<8x32xf32>
    %73 = vector.extract_strided_slice %70 {offsets = [0, 64], sizes = [8, 32], strides = [1, 1]} : vector<8x128xf32> to vector<8x32xf32>
    %74 = vector.extract_strided_slice %69 {offsets = [0, 96], sizes = [8, 32], strides = [1, 1]} : vector<8x128xf32> to vector<8x32xf32>
    %75 = arith.mulf %72, %59 : vector<8x32xf32>
    %76 = arith.mulf %71, %73 : vector<8x32xf32>
    %77 = arith.addf %75, %76 : vector<8x32xf32>
    %78 = math.tanh %77 : vector<8x32xf32>
    %79 = arith.mulf %74, %78 : vector<8x32xf32>
    %80 = vector.extract_strided_slice %22 {offsets = [24, 0], sizes = [8, 128], strides = [1, 1]} : vector<64x128xf32> to vector<8x128xf32>
    %cst_24 = arith.constant dense<0.000000e+00> : vector<8x128xf32>
    %81 = tpu.matmul %79, %23, %cst_24 {dimension_numbers = #tpu.dot_dimension_numbers<[1], [0], [0], [1], [0, 0, 1, 1], [], []>} : vector<8x32xf32>, vector<32x128xf32>, vector<8x128xf32> -> vector<8x128xf32>
    %82 = arith.addf %80, %81 : vector<8x128xf32>
    %83 = arith.negf %82 : vector<8x128xf32>
    %84 = math.exp %83 : vector<8x128xf32>
    %cst_25 = arith.constant 1.000000e+00 : f32
    %85 = vector.broadcast %cst_25 : f32 to vector<8x128xf32>
    %86 = arith.addf %85, %84 : vector<8x128xf32>
    %87 = arith.divf %85, %86 : vector<8x128xf32>
    %88 = math.tanh %82 : vector<8x128xf32>
    %89 = vector.extract_strided_slice %87 {offsets = [0, 0], sizes = [8, 32], strides = [1, 1]} : vector<8x128xf32> to vector<8x32xf32>
    %90 = vector.extract_strided_slice %87 {offsets = [0, 32], sizes = [8, 32], strides = [1, 1]} : vector<8x128xf32> to vector<8x32xf32>
    %91 = vector.extract_strided_slice %88 {offsets = [0, 64], sizes = [8, 32], strides = [1, 1]} : vector<8x128xf32> to vector<8x32xf32>
    %92 = vector.extract_strided_slice %87 {offsets = [0, 96], sizes = [8, 32], strides = [1, 1]} : vector<8x128xf32> to vector<8x32xf32>
    %93 = arith.mulf %90, %77 : vector<8x32xf32>
    %94 = arith.mulf %89, %91 : vector<8x32xf32>
    %95 = arith.addf %93, %94 : vector<8x32xf32>
    %96 = math.tanh %95 : vector<8x32xf32>
    %97 = arith.mulf %92, %96 : vector<8x32xf32>
    %98 = vector.extract_strided_slice %22 {offsets = [32, 0], sizes = [8, 128], strides = [1, 1]} : vector<64x128xf32> to vector<8x128xf32>
    %cst_26 = arith.constant dense<0.000000e+00> : vector<8x128xf32>
    %99 = tpu.matmul %97, %23, %cst_26 {dimension_numbers = #tpu.dot_dimension_numbers<[1], [0], [0], [1], [0, 0, 1, 1], [], []>} : vector<8x32xf32>, vector<32x128xf32>, vector<8x128xf32> -> vector<8x128xf32>
    %100 = arith.addf %98, %99 : vector<8x128xf32>
    %101 = arith.negf %100 : vector<8x128xf32>
    %102 = math.exp %101 : vector<8x128xf32>
    %cst_27 = arith.constant 1.000000e+00 : f32
    %103 = vector.broadcast %cst_27 : f32 to vector<8x128xf32>
    %104 = arith.addf %103, %102 : vector<8x128xf32>
    %105 = arith.divf %103, %104 : vector<8x128xf32>
    %106 = math.tanh %100 : vector<8x128xf32>
    %107 = vector.extract_strided_slice %105 {offsets = [0, 0], sizes = [8, 32], strides = [1, 1]} : vector<8x128xf32> to vector<8x32xf32>
    %108 = vector.extract_strided_slice %105 {offsets = [0, 32], sizes = [8, 32], strides = [1, 1]} : vector<8x128xf32> to vector<8x32xf32>
    %109 = vector.extract_strided_slice %106 {offsets = [0, 64], sizes = [8, 32], strides = [1, 1]} : vector<8x128xf32> to vector<8x32xf32>
    %110 = vector.extract_strided_slice %105 {offsets = [0, 96], sizes = [8, 32], strides = [1, 1]} : vector<8x128xf32> to vector<8x32xf32>
    %111 = arith.mulf %108, %95 : vector<8x32xf32>
    %112 = arith.mulf %107, %109 : vector<8x32xf32>
    %113 = arith.addf %111, %112 : vector<8x32xf32>
    %114 = math.tanh %113 : vector<8x32xf32>
    %115 = arith.mulf %110, %114 : vector<8x32xf32>
    %116 = vector.extract_strided_slice %22 {offsets = [40, 0], sizes = [8, 128], strides = [1, 1]} : vector<64x128xf32> to vector<8x128xf32>
    %cst_28 = arith.constant dense<0.000000e+00> : vector<8x128xf32>
    %117 = tpu.matmul %115, %23, %cst_28 {dimension_numbers = #tpu.dot_dimension_numbers<[1], [0], [0], [1], [0, 0, 1, 1], [], []>} : vector<8x32xf32>, vector<32x128xf32>, vector<8x128xf32> -> vector<8x128xf32>
    %118 = arith.addf %116, %117 : vector<8x128xf32>
    %119 = arith.negf %118 : vector<8x128xf32>
    %120 = math.exp %119 : vector<8x128xf32>
    %cst_29 = arith.constant 1.000000e+00 : f32
    %121 = vector.broadcast %cst_29 : f32 to vector<8x128xf32>
    %122 = arith.addf %121, %120 : vector<8x128xf32>
    %123 = arith.divf %121, %122 : vector<8x128xf32>
    %124 = math.tanh %118 : vector<8x128xf32>
    %125 = vector.extract_strided_slice %123 {offsets = [0, 0], sizes = [8, 32], strides = [1, 1]} : vector<8x128xf32> to vector<8x32xf32>
    %126 = vector.extract_strided_slice %123 {offsets = [0, 32], sizes = [8, 32], strides = [1, 1]} : vector<8x128xf32> to vector<8x32xf32>
    %127 = vector.extract_strided_slice %124 {offsets = [0, 64], sizes = [8, 32], strides = [1, 1]} : vector<8x128xf32> to vector<8x32xf32>
    %128 = vector.extract_strided_slice %123 {offsets = [0, 96], sizes = [8, 32], strides = [1, 1]} : vector<8x128xf32> to vector<8x32xf32>
    %129 = arith.mulf %126, %113 : vector<8x32xf32>
    %130 = arith.mulf %125, %127 : vector<8x32xf32>
    %131 = arith.addf %129, %130 : vector<8x32xf32>
    %132 = math.tanh %131 : vector<8x32xf32>
    %133 = arith.mulf %128, %132 : vector<8x32xf32>
    %134 = vector.extract_strided_slice %22 {offsets = [48, 0], sizes = [8, 128], strides = [1, 1]} : vector<64x128xf32> to vector<8x128xf32>
    %cst_30 = arith.constant dense<0.000000e+00> : vector<8x128xf32>
    %135 = tpu.matmul %133, %23, %cst_30 {dimension_numbers = #tpu.dot_dimension_numbers<[1], [0], [0], [1], [0, 0, 1, 1], [], []>} : vector<8x32xf32>, vector<32x128xf32>, vector<8x128xf32> -> vector<8x128xf32>
    %136 = arith.addf %134, %135 : vector<8x128xf32>
    %137 = arith.negf %136 : vector<8x128xf32>
    %138 = math.exp %137 : vector<8x128xf32>
    %cst_31 = arith.constant 1.000000e+00 : f32
    %139 = vector.broadcast %cst_31 : f32 to vector<8x128xf32>
    %140 = arith.addf %139, %138 : vector<8x128xf32>
    %141 = arith.divf %139, %140 : vector<8x128xf32>
    %142 = math.tanh %136 : vector<8x128xf32>
    %143 = vector.extract_strided_slice %141 {offsets = [0, 0], sizes = [8, 32], strides = [1, 1]} : vector<8x128xf32> to vector<8x32xf32>
    %144 = vector.extract_strided_slice %141 {offsets = [0, 32], sizes = [8, 32], strides = [1, 1]} : vector<8x128xf32> to vector<8x32xf32>
    %145 = vector.extract_strided_slice %142 {offsets = [0, 64], sizes = [8, 32], strides = [1, 1]} : vector<8x128xf32> to vector<8x32xf32>
    %146 = vector.extract_strided_slice %141 {offsets = [0, 96], sizes = [8, 32], strides = [1, 1]} : vector<8x128xf32> to vector<8x32xf32>
    %147 = arith.mulf %144, %131 : vector<8x32xf32>
    %148 = arith.mulf %143, %145 : vector<8x32xf32>
    %149 = arith.addf %147, %148 : vector<8x32xf32>
    %150 = math.tanh %149 : vector<8x32xf32>
    %151 = arith.mulf %146, %150 : vector<8x32xf32>
    %152 = vector.extract_strided_slice %22 {offsets = [56, 0], sizes = [8, 128], strides = [1, 1]} : vector<64x128xf32> to vector<8x128xf32>
    %cst_32 = arith.constant dense<0.000000e+00> : vector<8x128xf32>
    %153 = tpu.matmul %151, %23, %cst_32 {dimension_numbers = #tpu.dot_dimension_numbers<[1], [0], [0], [1], [0, 0, 1, 1], [], []>} : vector<8x32xf32>, vector<32x128xf32>, vector<8x128xf32> -> vector<8x128xf32>
    %154 = arith.addf %152, %153 : vector<8x128xf32>
    %155 = arith.negf %154 : vector<8x128xf32>
    %156 = math.exp %155 : vector<8x128xf32>
    %cst_33 = arith.constant 1.000000e+00 : f32
    %157 = vector.broadcast %cst_33 : f32 to vector<8x128xf32>
    %158 = arith.addf %157, %156 : vector<8x128xf32>
    %159 = arith.divf %157, %158 : vector<8x128xf32>
    %160 = math.tanh %154 : vector<8x128xf32>
    %161 = vector.extract_strided_slice %159 {offsets = [0, 0], sizes = [8, 32], strides = [1, 1]} : vector<8x128xf32> to vector<8x32xf32>
    %162 = vector.extract_strided_slice %159 {offsets = [0, 32], sizes = [8, 32], strides = [1, 1]} : vector<8x128xf32> to vector<8x32xf32>
    %163 = vector.extract_strided_slice %160 {offsets = [0, 64], sizes = [8, 32], strides = [1, 1]} : vector<8x128xf32> to vector<8x32xf32>
    %164 = vector.extract_strided_slice %159 {offsets = [0, 96], sizes = [8, 32], strides = [1, 1]} : vector<8x128xf32> to vector<8x32xf32>
    %165 = arith.mulf %162, %149 : vector<8x32xf32>
    %166 = arith.mulf %161, %163 : vector<8x32xf32>
    %167 = arith.addf %165, %166 : vector<8x32xf32>
    %168 = math.tanh %167 : vector<8x32xf32>
    %169 = arith.mulf %164, %168 : vector<8x32xf32>
    %170 = vector.extract_strided_slice %169 {offsets = [0, 0], sizes = [4, 32], strides = [1, 1]} : vector<8x32xf32> to vector<4x32xf32>
    %c646 = arith.constant 646 : index
    %c0_34 = arith.constant 0 : index
    %171 = vector.load %arg1[%c646, %c0_34] : memref<744x128xf32, #tpu.memory_space<vmem>>, vector<32x128xf32>
    %cst_35 = arith.constant dense<0.000000e+00> : vector<4x128xf32>
    %172 = tpu.matmul %170, %171, %cst_35 {dimension_numbers = #tpu.dot_dimension_numbers<[1], [0], [0], [1], [0, 0, 1, 1], [], []>} : vector<4x32xf32>, vector<32x128xf32>, vector<4x128xf32> -> vector<4x128xf32>
    %c678 = arith.constant 678 : index
    %c0_36 = arith.constant 0 : index
    %173 = vector.load %arg1[%c678, %c0_36] : memref<744x128xf32, #tpu.memory_space<vmem>>, vector<1x128xf32>
    %174 = vector.broadcast %173 : vector<1x128xf32> to vector<4x128xf32>
    %175 = arith.addf %172, %174 : vector<4x128xf32>
    %176 = vector.extract_strided_slice %169 {offsets = [0, 0], sizes = [2, 32], strides = [1, 1]} : vector<8x32xf32> to vector<2x32xf32>
    %c679 = arith.constant 679 : index
    %c0_37 = arith.constant 0 : index
    %177 = vector.load %arg1[%c679, %c0_37] : memref<744x128xf32, #tpu.memory_space<vmem>>, vector<32x128xf32>
    %cst_38 = arith.constant dense<0.000000e+00> : vector<2x128xf32>
    %178 = tpu.matmul %176, %177, %cst_38 {dimension_numbers = #tpu.dot_dimension_numbers<[1], [0], [0], [1], [0, 0, 1, 1], [], []>} : vector<2x32xf32>, vector<32x128xf32>, vector<2x128xf32> -> vector<2x128xf32>
    %179 = vector.extract_strided_slice %169 {offsets = [2, 0], sizes = [2, 32], strides = [1, 1]} : vector<8x32xf32> to vector<2x32xf32>
    %c711 = arith.constant 711 : index
    %c0_39 = arith.constant 0 : index
    %180 = vector.load %arg1[%c711, %c0_39] : memref<744x128xf32, #tpu.memory_space<vmem>>, vector<32x128xf32>
    %cst_40 = arith.constant dense<0.000000e+00> : vector<2x128xf32>
    %181 = tpu.matmul %179, %180, %cst_40 {dimension_numbers = #tpu.dot_dimension_numbers<[1], [0], [0], [1], [0, 0, 1, 1], [], []>} : vector<2x32xf32>, vector<32x128xf32>, vector<2x128xf32> -> vector<2x128xf32>
    %182 = arith.addf %178, %181 : vector<2x128xf32>
    %c743 = arith.constant 743 : index
    %c0_41 = arith.constant 0 : index
    %183 = vector.load %arg1[%c743, %c0_41] : memref<744x128xf32, #tpu.memory_space<vmem>>, vector<1x128xf32>
    %184 = vector.broadcast %183 : vector<1x128xf32> to vector<2x128xf32>
    %185 = arith.addf %182, %184 : vector<2x128xf32>
    %cst_42 = arith.constant 0.000000e+00 : f32
    %186 = vector.broadcast %cst_42 : f32 to vector<2x128xf32>
    %187 = tpu.concatenate %175, %185, %186 in 0 : vector<4x128xf32>, vector<2x128xf32>, vector<2x128xf32> -> vector<8x128xf32>
    %c0_43 = arith.constant 0 : index
    %c0_44 = arith.constant 0 : index
    %188 = vector.load %arg2[%c0_43, %c0_44] : memref<8x128xf32, #tpu.memory_space<vmem>>, vector<8x128xf32>
    tpu.vector_store %arg2[%c0_43, %c0_44], %187 {strides = array<i32>} : memref<8x128xf32, #tpu.memory_space<vmem>>, vector<8x128xf32>,
    return
  }
}

</mosaic_0001>

<llo_original>
// kernel: u_t_train_forward.1
$region0: #{u_t_train_forward.1}
  #allocation0 [shape = 'u32[]', space=smem, size = 0x4, offset = 0x4, fixed_abs, tag = 'smem constant byte address 0x4 - core index']
  #allocation1 [shape = 'u32[144,128]{1,0:T(1,128)}', space=vmem, size = 0x12000, scoped, tag = 'internal scratch']
  %s0 = inlined_call_operand.hbm [shape: f32[2,8,228], index: 0, kind: input, shape index: {}]
  %s1 = inlined_call_operand.hbm [shape: f32[744,128], index: 1, kind: input, shape index: {}]
  %s2 = inlined_call_operand.vmem [shape: f32[8,128], index: 2, kind: output, shape index: {}]
  %s3 = sld [smem:[#allocation0]]
  $region26: #{u_t_train_forward.1} parent=0
    _
  %s5 = ssub.s32 1, %s3
  %s6 = scalar_select 0, %s5, %s3
  $region1: #{u_t_train_forward.1} parent=0
    #allocation2 [shape = 'u8[16384]{0}', space=vmem, size = 0x4000, scoped, tag = 'input window, operand 0, single buffered']
    #allocation3 [shape = 's32[1]{0}', space=sflag, size = 0x4, scoped, tag = 'scoped memory for u_t_train_forward.1']
    #allocation4 [shape = 'u8[380928]{0}', space=vmem, size = 0x5d000, scoped, tag = 'input window, operand 1, single buffered']
    #allocation5 [shape = 's32[1]{0}', space=sflag, size = 0x4, scoped, tag = 'scoped memory for u_t_train_forward.1']
    %7 = vsyncpa [#allocation3], 0
    %8 = vsyncpa [#allocation5], 0
    // Predicated region
    $region2: #{u_t_train_forward.1} parent=1 // pred_check
      _
    $region3: #{u_t_train_forward.1} parent=1 // pred_check_branch
      %10 = sbr.rel (0) target = $region5
    $region4: #{u_t_train_forward.1} parent=1 // pred_region
      %s12 = ssub.s32 512, 512
      %13 = vsyncadd [#allocation3], %s12
      %s14 = sshll.u32 [#allocation2], 4
      %s15 = int_to_ptr.vmem [resolvable:$true] %s14
      %20 = dma.hbm_to_vmem [thread:$0]  %s0, 512, %s15, [#allocation3], 256, 256, 16
    $region5: #{u_t_train_forward.1} parent=1 // pred_fallthru
      _
    // Predicated region
    $region6: #{u_t_train_forward.1} parent=1 // pred_check
      _
    $region7: #{u_t_train_forward.1} parent=1 // pred_check_branch
      %22 = sbr.rel (0) target = $region9
    $region8: #{u_t_train_forward.1} parent=1 // pred_region
      %s24 = ssub.s32 11904, 11904
      %25 = vsyncadd [#allocation5], %s24
      %s26 = sshll.u32 [#allocation4], 4
      %s27 = int_to_ptr.vmem [resolvable:$true] %s26
      %32 = dma.hbm_to_vmem [thread:$0]  %s1, 11904, %s27, [#allocation5], 128, 128, 8
    $region9: #{u_t_train_forward.1} parent=1 // pred_fallthru
      _
    // Predicated region
    $region10: #{u_t_train_forward.1} parent=1 // pred_check
      _
    $region11: #{u_t_train_forward.1} parent=1 // pred_check_branch
      %34 = sbr.rel (0) target = $region13
    $region12: #{u_t_train_forward.1} parent=1 // pred_region
      %35 = dma.done [#allocation3], 512
    $region13: #{u_t_train_forward.1} parent=1 // pred_fallthru
      _
    // Predicated region
    $region14: #{u_t_train_forward.1} parent=1 // pred_check
      _
    $region15: #{u_t_train_forward.1} parent=1 // pred_check_branch
      %37 = sbr.rel (0) target = $region17
    $region16: #{u_t_train_forward.1} parent=1 // pred_region
      %38 = dma.done [#allocation5], 11904
    $region17: #{u_t_train_forward.1} parent=1 // pred_fallthru
      _
    %v39 = vld [vmem:[#allocation2] sm:$0xff]
    %v40 = vld [vmem:[#allocation2 + $0x8] sm:$0xff]
    %v41 = vld [vmem:[#allocation2 + $0x10] sm:$0xff]
    %v42 = vld [vmem:[#allocation2 + $0x18] sm:$0xff]
    %v43 = vld [vmem:[#allocation4] sm:$0xff]
    %v44 = vld [vmem:[#allocation4 + $0x8] sm:$0xff]
    %v45 = vld [vmem:[#allocation4 + $0x10] sm:$0xff]
    %v46 = vld [vmem:[#allocation4 + $0x18] sm:$0xff]
    %v47 = vld [vmem:[#allocation4 + $0x20] sm:$0xff]
    %v48 = vld [vmem:[#allocation4 + $0x28] sm:$0xff]
    %v49 = vld [vmem:[#allocation4 + $0x30] sm:$0xff]
    %v50 = vld [vmem:[#allocation4 + $0x38] sm:$0xff]
    %v51 = vld [vmem:[#allocation4 + $0x40] sm:$0xff]
    %v52 = vld [vmem:[#allocation4 + $0x48] sm:$0xff]
    %v53 = vld [vmem:[#allocation4 + $0x50] sm:$0xff]
    %v54 = vld [vmem:[#allocation4 + $0x58] sm:$0xff]
    %v55 = vld [vmem:[#allocation4 + $0x60] sm:$0xff]
    %v56 = vld [vmem:[#allocation4 + $0x68] sm:$0xff]
    %v57 = vld [vmem:[#allocation4 + $0x70] sm:$0xff]
    %v58 = vld [vmem:[#allocation4 + $0x78] sm:$0xff]
    %v59 = vld [vmem:[#allocation4 + $0x80] sm:$0xff]
    %v60 = vld [vmem:[#allocation4 + $0x88] sm:$0xff]
    %v61 = vld [vmem:[#allocation4 + $0x90] sm:$0xff]
    %v62 = vld [vmem:[#allocation4 + $0x98] sm:$0xff]
    %v63 = vld [vmem:[#allocation4 + $0xa0] sm:$0xff]
    %v64 = vld [vmem:[#allocation4 + $0xa8] sm:$0xff]
    %v65 = vld [vmem:[#allocation4 + $0xb0] sm:$0xff]
    %v66 = vld [vmem:[#allocation4 + $0xb8] sm:$0xff]
    %v67 = vld [vmem:[#allocation4 + $0xc0] sm:$0xff]
    %v68 = vld [vmem:[#allocation4 + $0xc8] sm:$0xff]
    %v69 = vld [vmem:[#allocation4 + $0xd0] sm:$0xff]
    %v70 = vld [vmem:[#allocation4 + $0xd8] sm:$0xff]
    %v71 = vld [vmem:[#allocation4 + $0xe0] sm:$0xf]
    %v72 = vld [vmem:[#allocation4 + $0xe4] sm:$0x1]
    %v73 = vlaneseq
    %v74 = vshrl.u32 %v73, 7
    %v75 = vsub.s32 0, %v74
    %v76 = vrot.slane %v72, %v75
    %vm77 = vcmask 818176
    %v79 = vsel %vm77, %v40, 0
    %v82 = vsel %vm77, %v42, 0
    %vm84 = vcmask 1043456
    %v86 = vsel %vm84, %v71, 0
    %88 = vmatprep.subr.mxu0 0.0
    %89 = vmatpush1.msra.mxu0 %v58
    %90 = vmatprep.subr.mxu0 0.0
    %91 = vmatpush1.msra.mxu0 %v57
    %92 = vmatprep.subr.mxu0 0.0
    %93 = vmatpush1.msra.mxu0 %v56
    %94 = vmatprep.subr.mxu0 0.0
    %95 = vmatpush1.msra.mxu0 %v55
    %96 = vmatprep.subr.mxu0 0.0
    %97 = vmatpush1.msra.mxu0 %v54
    %98 = vmatprep.subr.mxu0 0.0
    %99 = vmatpush1.msra.mxu0 %v53
    %100 = vmatprep.subr.mxu0 0.0
    %101 = vmatpush1.msra.mxu0 %v52
    %102 = vmatprep.subr.mxu0 0.0
    %103 = vmatpush1.msra.mxu0 %v51
    %104 = vmatprep.subr.mxu0 0.0
    %105 = vmatpush1.msra.mxu0 %v50
    %106 = vmatprep.subr.mxu0 0.0
    %107 = vmatpush1.msra.mxu0 %v49
    %108 = vmatprep.subr.mxu0 0.0
    %109 = vmatpush1.msra.mxu0 %v48
    %110 = vmatprep.subr.mxu0 0.0
    %111 = vmatpush1.msra.mxu0 %v47
    %112 = vmatprep.subr.mxu0 0.0
    %113 = vmatpush1.msra.mxu0 %v46
    %114 = vmatprep.subr.mxu0 0.0
    %115 = vmatpush1.msra.mxu0 %v45
    %116 = vmatprep.subr.mxu0 0.0
    %117 = vmatpush1.msra.mxu0 %v44
    %118 = vmatprep.subr.mxu0 0.0
    %119 = vmatpush1.msra.mxu0 %v43
    %120 = vmatprep.subr.mxu0 0.0
    %121 = vmatpush2.msra.mxu0 0.0
    %122 = vmatprep.subr.mxu0 0.0
    %123 = vmatpush2.msra.mxu0 0.0
    %124 = vmatprep.subr.mxu0 0.0
    %125 = vmatpush2.msra.mxu0 0.0
    %126 = vmatprep.subr.mxu0 0.0
    %127 = vmatpush2.msra.mxu0 %v86
    %128 = vmatprep.subr.mxu0 0.0
    %129 = vmatpush2.msra.mxu0 %v70
    %130 = vmatprep.subr.mxu0 0.0
    %131 = vmatpush2.msra.mxu0 %v69
    %132 = vmatprep.subr.mxu0 0.0
    %133 = vmatpush2.msra.mxu0 %v68
    %134 = vmatprep.subr.mxu0 0.0
    %135 = vmatpush2.msra.mxu0 %v67
    %136 = vmatprep.subr.mxu0 0.0
    %137 = vmatpush2.msra.mxu0 %v66
    %138 = vmatprep.subr.mxu0 0.0
    %139 = vmatpush2.msra.mxu0 %v65
    %140 = vmatprep.subr.mxu0 0.0
    %141 = vmatpush2.msra.mxu0 %v64
    %142 = vmatprep.subr.mxu0 0.0
    %143 = vmatpush2.msra.mxu0 %v63
    %144 = vmatprep.subr.mxu0 0.0
    %145 = vmatpush2.msra.mxu0 %v62
    %146 = vmatprep.subr.mxu0 0.0
    %147 = vmatpush2.msra.mxu0 %v61
    %148 = vmatprep.subr.mxu0 0.0
    %149 = vmatpush2.msra.mxu0 %v60
    %150 = vmatprep.subr.mxu0 0.0
    %151 = vmatpush2.msra.mxu0 %v59
    %152 = vmatprep.mubr.f32.mxu0 %v79
    %153 = vmatmul.mubr.f32.gmra.mxu0 %v39
    %v154 = vpop.f32.mrf.mxu0
    %v155 = vadd.f32 %v76, %v154
    %v156 = vpop.f32.mrf.mxu0
    %157 = vmatprep.mubr.f32.mxu0 %v82
    %158 = vmatmul.mubr.f32.gmra.mxu0 %v41
    %v159 = vpop.f32.mrf.mxu0
    %v160 = vadd.f32 %v76, %v159
    %v161 = vpop.f32.mrf.mxu0
    %162 = vdwg.mxu0
    %v163 = vmax.f32 %v155, 0.0
    %v164 = vmax.f32 %v160, 0.0
    %v165 = vld [vmem:[#allocation4 + $0xe5] sm:$0xff]
    %v166 = vld [vmem:[#allocation4 + $0xed] sm:$0xff]
    %v167 = vld [vmem:[#allocation4 + $0xf5] sm:$0xff]
    %v168 = vld [vmem:[#allocation4 + $0xfd] sm:$0xff]
    %v169 = vld [vmem:[#allocation4 + $0x105] sm:$0xff]
    %v170 = vld [vmem:[#allocation4 + $0x10d] sm:$0xff]
    %v171 = vld [vmem:[#allocation4 + $0x115] sm:$0xff]
    %v172 = vld [vmem:[#allocation4 + $0x11d] sm:$0xff]
    %v173 = vld [vmem:[#allocation4 + $0x125] sm:$0xff]
    %v174 = vld [vmem:[#allocation4 + $0x12d] sm:$0xff]
    %v175 = vld [vmem:[#allocation4 + $0x135] sm:$0xff]
    %v176 = vld [vmem:[#allocation4 + $0x13d] sm:$0xff]
    %v177 = vld [vmem:[#allocation4 + $0x145] sm:$0xff]
    %v178 = vld [vmem:[#allocation4 + $0x14d] sm:$0xff]
    %v179 = vld [vmem:[#allocation4 + $0x155] sm:$0xff]
    %v180 = vld [vmem:[#allocation4 + $0x15d] sm:$0xff]
    %181 = vmatprep.subr.mxu0 0.0
    %182 = vmatpush1.msra.mxu0 %v180
    %183 = vmatprep.subr.mxu0 0.0
    %184 = vmatpush1.msra.mxu0 %v179
    %185 = vmatprep.subr.mxu0 0.0
    %186 = vmatpush1.msra.mxu0 %v178
    %187 = vmatprep.subr.mxu0 0.0
    %188 = vmatpush1.msra.mxu0 %v177
    %189 = vmatprep.subr.mxu0 0.0
    %190 = vmatpush1.msra.mxu0 %v176
    %191 = vmatprep.subr.mxu0 0.0
    %192 = vmatpush1.msra.mxu0 %v175
    %193 = vmatprep.subr.mxu0 0.0
    %194 = vmatpush1.msra.mxu0 %v174
    %195 = vmatprep.subr.mxu0 0.0
    %196 = vmatpush1.msra.mxu0 %v173
    %197 = vmatprep.subr.mxu0 0.0
    %198 = vmatpush1.msra.mxu0 %v172
    %199 = vmatprep.subr.mxu0 0.0
    %200 = vmatpush1.msra.mxu0 %v171
    %201 = vmatprep.subr.mxu0 0.0
    %202 = vmatpush1.msra.mxu0 %v170
    %203 = vmatprep.subr.mxu0 0.0
    %204 = vmatpush1.msra.mxu0 %v169
    %205 = vmatprep.subr.mxu0 0.0
    %206 = vmatpush1.msra.mxu0 %v168
    %207 = vmatprep.subr.mxu0 0.0
    %208 = vmatpush1.msra.mxu0 %v167
    %209 = vmatprep.subr.mxu0 0.0
    %210 = vmatpush1.msra.mxu0 %v166
    %211 = vmatprep.subr.mxu0 0.0
    %212 = vmatpush1.msra.mxu0 %v165
    %213 = vmatprep.subr.mxu0 0.0
    %214 = vmatpush2.msra.mxu0 0.0
    %215 = vmatprep.subr.mxu0 0.0
    %216 = vmatpush2.msra.mxu0 0.0
    %217 = vmatprep.subr.mxu0 0.0
    %218 = vmatpush2.msra.mxu0 0.0
    %219 = vmatprep.subr.mxu0 0.0
    %220 = vmatpush2.msra.mxu0 0.0
    %221 = vmatprep.subr.mxu0 0.0
    %222 = vmatpush2.msra.mxu0 0.0
    %223 = vmatprep.subr.mxu0 0.0
    %224 = vmatpush2.msra.mxu0 0.0
    %225 = vmatprep.subr.mxu0 0.0
    %226 = vmatpush2.msra.mxu0 0.0
    %227 = vmatprep.subr.mxu0 0.0
    %228 = vmatpush2.msra.mxu0 0.0
    %229 = vmatprep.subr.mxu0 0.0
    %230 = vmatpush2.msra.mxu0 0.0
    %231 = vmatprep.subr.mxu0 0.0
    %232 = vmatpush2.msra.mxu0 0.0
    %233 = vmatprep.subr.mxu0 0.0
    %234 = vmatpush2.msra.mxu0 0.0
    %235 = vmatprep.subr.mxu0 0.0
    %236 = vmatpush2.msra.mxu0 0.0
    %237 = vmatprep.subr.mxu0 0.0
    %238 = vmatpush2.msra.mxu0 0.0
    %239 = vmatprep.subr.mxu0 0.0
    %240 = vmatpush2.msra.mxu0 0.0
    %241 = vmatprep.subr.mxu0 0.0
    %242 = vmatpush2.msra.mxu0 0.0
    %243 = vmatprep.subr.mxu0 0.0
    %244 = vmatpush2.msra.mxu0 0.0
    %245 = vmatprep.mubr.f32.mxu0 0.0
    %246 = vmatmul.mubr.f32.gmra.mxu0 %v163
    %v247 = vpop.f32.mrf.mxu0
    %v248 = vadd.f32 0.0, %v247
    %v249 = vpop.f32.mrf.mxu0
    %250 = vmatprep.mubr.f32.mxu0 0.0
    %251 = vmatmul.mubr.f32.gmra.mxu0 %v164
    %v252 = vpop.f32.mrf.mxu0
    %v253 = vadd.f32 0.0, %v252
    %v254 = vpop.f32.mrf.mxu0
    %255 = vdwg.mxu0
    %v256 = vld [vmem:[#allocation4 + $0x165] sm:$0xff]
    %v257 = vld [vmem:[#allocation4 + $0x16d] sm:$0xff]
    %v258 = vld [vmem:[#allocation4 + $0x175] sm:$0xff]
    %v259 = vld [vmem:[#allocation4 + $0x17d] sm:$0xff]
    %v260 = vld [vmem:[#allocation4 + $0x185] sm:$0xff]
    %v261 = vld [vmem:[#allocation4 + $0x18d] sm:$0xff]
    %v262 = vld [vmem:[#allocation4 + $0x195] sm:$0xff]
    %v263 = vld [vmem:[#allocation4 + $0x19d] sm:$0xff]
    %v264 = vld [vmem:[#allocation4 + $0x1a5] sm:$0xff]
    %v265 = vld [vmem:[#allocation4 + $0x1ad] sm:$0xff]
    %v266 = vld [vmem:[#allocation4 + $0x1b5] sm:$0xff]
    %v267 = vld [vmem:[#allocation4 + $0x1bd] sm:$0xff]
    %v268 = vld [vmem:[#allocation4 + $0x1c5] sm:$0xff]
    %v269 = vld [vmem:[#allocation4 + $0x1cd] sm:$0xff]
    %v270 = vld [vmem:[#allocation4 + $0x1d5] sm:$0xff]
    %v271 = vld [vmem:[#allocation4 + $0x1dd] sm:$0xff]
    %272 = vmatprep.subr.mxu0 0.0
    %273 = vmatpush1.msra.mxu0 %v271
    %274 = vmatprep.subr.mxu0 0.0
    %275 = vmatpush1.msra.mxu0 %v270
    %276 = vmatprep.subr.mxu0 0.0
    %277 = vmatpush1.msra.mxu0 %v269
    %278 = vmatprep.subr.mxu0 0.0
    %279 = vmatpush1.msra.mxu0 %v268
    %280 = vmatprep.subr.mxu0 0.0
    %281 = vmatpush1.msra.mxu0 %v267
    %282 = vmatprep.subr.mxu0 0.0
    %283 = vmatpush1.msra.mxu0 %v266
    %284 = vmatprep.subr.mxu0 0.0
    %285 = vmatpush1.msra.mxu0 %v265
    %286 = vmatprep.subr.mxu0 0.0
    %287 = vmatpush1.msra.mxu0 %v264
    %288 = vmatprep.subr.mxu0 0.0
    %289 = vmatpush1.msra.mxu0 %v263
    %290 = vmatprep.subr.mxu0 0.0
    %291 = vmatpush1.msra.mxu0 %v262
    %292 = vmatprep.subr.mxu0 0.0
    %293 = vmatpush1.msra.mxu0 %v261
    %294 = vmatprep.subr.mxu0 0.0
    %295 = vmatpush1.msra.mxu0 %v260
    %296 = vmatprep.subr.mxu0 0.0
    %297 = vmatpush1.msra.mxu0 %v259
    %298 = vmatprep.subr.mxu0 0.0
    %299 = vmatpush1.msra.mxu0 %v258
    %300 = vmatprep.subr.mxu0 0.0
    %301 = vmatpush1.msra.mxu0 %v257
    %302 = vmatprep.subr.mxu0 0.0
    %303 = vmatpush1.msra.mxu0 %v256
    %304 = vmatprep.subr.mxu0 0.0
    %305 = vmatpush2.msra.mxu0 0.0
    %306 = vmatprep.subr.mxu0 0.0
    %307 = vmatpush2.msra.mxu0 0.0
    %308 = vmatprep.subr.mxu0 0.0
    %309 = vmatpush2.msra.mxu0 0.0
    %310 = vmatprep.subr.mxu0 0.0
    %311 = vmatpush2.msra.mxu0 0.0
    %312 = vmatprep.subr.mxu0 0.0
    %313 = vmatpush2.msra.mxu0 0.0
    %314 = vmatprep.subr.mxu0 0.0
    %315 = vmatpush2.msra.mxu0 0.0
    %316 = vmatprep.subr.mxu0 0.0
    %317 = vmatpush2.msra.mxu0 0.0
    %318 = vmatprep.subr.mxu0 0.0
    %319 = vmatpush2.msra.mxu0 0.0
    %320 = vmatprep.subr.mxu0 0.0
    %321 = vmatpush2.msra.mxu0 0.0
    %322 = vmatprep.subr.mxu0 0.0
    %323 = vmatpush2.msra.mxu0 0.0
    %324 = vmatprep.subr.mxu0 0.0
    %325 = vmatpush2.msra.mxu0 0.0
    %326 = vmatprep.subr.mxu0 0.0
    %327 = vmatpush2.msra.mxu0 0.0
    %328 = vmatprep.subr.mxu0 0.0
    %329 = vmatpush2.msra.mxu0 0.0
    %330 = vmatprep.subr.mxu0 0.0
    %331 = vmatpush2.msra.mxu0 0.0
    %332 = vmatprep.subr.mxu0 0.0
    %333 = vmatpush2.msra.mxu0 0.0
    %334 = vmatprep.subr.mxu0 0.0
    %335 = vmatpush2.msra.mxu0 0.0
    %336 = vmatprep.mubr.f32.mxu0 0.0
    %337 = vmatmul.mubr.f32.gmra.mxu0 %v163
    %v338 = vpop.f32.mrf.mxu0
    %v339 = vadd.f32 0.0, %v338
    %v340 = vpop.f32.mrf.mxu0
    %341 = vmatprep.mubr.f32.mxu0 0.0
    %342 = vmatmul.mubr.f32.gmra.mxu0 %v164
    %v343 = vpop.f32.mrf.mxu0
    %v344 = vadd.f32 0.0, %v343
    %v345 = vpop.f32.mrf.mxu0
    %346 = vdwg.mxu0
    %v347 = vld [vmem:[#allocation4 + $0x1e5] sm:$0xff]
    %v348 = vld [vmem:[#allocation4 + $0x1ed] sm:$0xff]
    %v349 = vld [vmem:[#allocation4 + $0x1f5] sm:$0xff]
    %v350 = vld [vmem:[#allocation4 + $0x1fd] sm:$0xff]
    %v351 = vld [vmem:[#allocation4 + $0x205] sm:$0xff]
    %v352 = vld [vmem:[#allocation4 + $0x20d] sm:$0xff]
    %v353 = vld [vmem:[#allocation4 + $0x215] sm:$0xff]
    %v354 = vld [vmem:[#allocation4 + $0x21d] sm:$0xff]
    %v355 = vld [vmem:[#allocation4 + $0x225] sm:$0xff]
    %v356 = vld [vmem:[#allocation4 + $0x22d] sm:$0xff]
    %v357 = vld [vmem:[#allocation4 + $0x235] sm:$0xff]
    %v358 = vld [vmem:[#allocation4 + $0x23d] sm:$0xff]
    %v359 = vld [vmem:[#allocation4 + $0x245] sm:$0xff]
    %v360 = vld [vmem:[#allocation4 + $0x24d] sm:$0xff]
    %v361 = vld [vmem:[#allocation4 + $0x255] sm:$0xff]
    %v362 = vld [vmem:[#allocation4 + $0x25d] sm:$0xff]
    %v363 = vld [vmem:[#allocation4 + $0x265] sm:$0x1]
    %vm364 = vcmask 130048
    %v366 = vsel %vm364, %v355, 0
    %v369 = vsel %vm364, %v356, 0
    %v372 = vsel %vm364, %v357, 0
    %v375 = vsel %vm364, %v358, 0
    %v378 = vsel %vm364, %v359, 0
    %v381 = vsel %vm364, %v360, 0
    %v384 = vsel %vm364, %v361, 0
    %v387 = vsel %vm364, %v362, 0
    %389 = vmatprep.subr.mxu0 0.0
    %390 = vmatpush1.msra.mxu0 0.0
    %391 = vmatprep.subr.mxu0 0.0
    %392 = vmatpush1.msra.mxu0 0.0
    %393 = vmatprep.subr.mxu0 0.0
    %394 = vmatpush1.msra.mxu0 0.0
    %395 = vmatprep.subr.mxu0 0.0
    %396 = vmatpush1.msra.mxu0 0.0
    %397 = vmatprep.subr.mxu0 0.0
    %398 = vmatpush1.msra.mxu0 0.0
    %399 = vmatprep.subr.mxu0 0.0
    %400 = vmatpush1.msra.mxu0 0.0
    %401 = vmatprep.subr.mxu0 0.0
    %402 = vmatpush1.msra.mxu0 0.0
    %403 = vmatprep.subr.mxu0 0.0
    %404 = vmatpush1.msra.mxu0 0.0
    %405 = vmatprep.subr.mxu0 0.0
    %406 = vmatpush1.msra.mxu0 0.0
    %407 = vmatprep.subr.mxu0 0.0
    %408 = vmatpush1.msra.mxu0 0.0
    %409 = vmatprep.subr.mxu0 0.0
    %410 = vmatpush1.msra.mxu0 0.0
    %411 = vmatprep.subr.mxu0 0.0
    %412 = vmatpush1.msra.mxu0 0.0
    %413 = vmatprep.subr.mxu0 0.0
    %414 = vmatpush1.msra.mxu0 0.0
    %415 = vmatprep.subr.mxu0 0.0
    %416 = vmatpush1.msra.mxu0 0.0
    %417 = vmatprep.subr.mxu0 0.0
    %418 = vmatpush1.msra.mxu0 %v344
    %419 = vmatprep.subr.mxu0 0.0
    %420 = vmatpush1.msra.mxu0 %v339
    %421 = vmatprep.subr.mxu0 0.0
    %422 = vmatpush2.msra.mxu0 0.0
    %423 = vmatprep.subr.mxu0 0.0
    %424 = vmatpush2.msra.mxu0 0.0
    %425 = vmatprep.subr.mxu0 0.0
    %426 = vmatpush2.msra.mxu0 0.0
    %427 = vmatprep.subr.mxu0 0.0
    %428 = vmatpush2.msra.mxu0 0.0
    %429 = vmatprep.subr.mxu0 0.0
    %430 = vmatpush2.msra.mxu0 0.0
    %431 = vmatprep.subr.mxu0 0.0
    %432 = vmatpush2.msra.mxu0 0.0
    %433 = vmatprep.subr.mxu0 0.0
    %434 = vmatpush2.msra.mxu0 0.0
    %435 = vmatprep.subr.mxu0 0.0
    %436 = vmatpush2.msra.mxu0 0.0
    %437 = vmatprep.subr.mxu0 0.0
    %438 = vmatpush2.msra.mxu0 0.0
    %439 = vmatprep.subr.mxu0 0.0
    %440 = vmatpush2.msra.mxu0 0.0
    %441 = vmatprep.subr.mxu0 0.0
    %442 = vmatpush2.msra.mxu0 0.0
    %443 = vmatprep.subr.mxu0 0.0
    %444 = vmatpush2.msra.mxu0 0.0
    %445 = vmatprep.subr.mxu0 0.0
    %446 = vmatpush2.msra.mxu0 0.0
    %447 = vmatprep.subr.mxu0 0.0
    %448 = vmatpush2.msra.mxu0 0.0
    %449 = vmatprep.subr.mxu0 0.0
    %450 = vmatpush2.msra.mxu0 0.0
    %451 = vmatprep.subr.mxu0 0.0
    %452 = vmatpush2.msra.mxu0 0.0
    %453 = vmatprep.mubr.f32.mxu0 0.0
    %454 = vmatmul.mubr.f32.gmra.mxu0 %v366
    %v455 = vpop.f32.mrf.mxu0
    %v456 = vadd.f32 0.0, %v455
    %v457 = vpop.f32.mrf.mxu0
    %458 = vmatprep.mubr.f32.mxu0 0.0
    %459 = vmatmul.mubr.f32.gmra.mxu0 %v369
    %v460 = vpop.f32.mrf.mxu0
    %v461 = vadd.f32 0.0, %v460
    %v462 = vpop.f32.mrf.mxu0
    %463 = vmatprep.mubr.f32.mxu0 0.0
    %464 = vmatmul.mubr.f32.gmra.mxu0 %v372
    %v465 = vpop.f32.mrf.mxu0
    %v466 = vadd.f32 0.0, %v465
    %v467 = vpop.f32.mrf.mxu0
    %468 = vmatprep.mubr.f32.mxu0 0.0
    %469 = vmatmul.mubr.f32.gmra.mxu0 %v375
    %v470 = vpop.f32.mrf.mxu0
    %v471 = vadd.f32 0.0, %v470
    %v472 = vpop.f32.mrf.mxu0
    %473 = vmatprep.mubr.f32.mxu0 0.0
    %474 = vmatmul.mubr.f32.gmra.mxu0 %v378
    %v475 = vpop.f32.mrf.mxu0
    %v476 = vadd.f32 0.0, %v475
    %v477 = vpop.f32.mrf.mxu0
    %478 = vmatprep.mubr.f32.mxu0 0.0
    %479 = vmatmul.mubr.f32.gmra.mxu0 %v381
    %v480 = vpop.f32.mrf.mxu0
    %v481 = vadd.f32 0.0, %v480
    %v482 = vpop.f32.mrf.mxu0
    %483 = vmatprep.mubr.f32.mxu0 0.0
    %484 = vmatmul.mubr.f32.gmra.mxu0 %v384
    %v485 = vpop.f32.mrf.mxu0
    %v486 = vadd.f32 0.0, %v485
    %v487 = vpop.f32.mrf.mxu0
    %488 = vmatprep.mubr.f32.mxu0 0.0
    %489 = vmatmul.mubr.f32.gmra.mxu0 %v387
    %v490 = vpop.f32.mrf.mxu0
    %v491 = vadd.f32 0.0, %v490
    %v492 = vpop.f32.mrf.mxu0
    %493 = vdwg.mxu0
    %v495 = vsel %vm364, %v347, 0
    %v498 = vsel %vm364, %v348, 0
    %v501 = vsel %vm364, %v349, 0
    %v504 = vsel %vm364, %v350, 0
    %v507 = vsel %vm364, %v351, 0
    %v510 = vsel %vm364, %v352, 0
    %v513 = vsel %vm364, %v353, 0
    %v516 = vsel %vm364, %v354, 0
    %518 = vmatprep.subr.mxu0 0.0
    %519 = vmatpush1.msra.mxu0 0.0
    %520 = vmatprep.subr.mxu0 0.0
    %521 = vmatpush1.msra.mxu0 0.0
    %522 = vmatprep.subr.mxu0 0.0
    %523 = vmatpush1.msra.mxu0 0.0
    %524 = vmatprep.subr.mxu0 0.0
    %525 = vmatpush1.msra.mxu0 0.0
    %526 = vmatprep.subr.mxu0 0.0
    %527 = vmatpush1.msra.mxu0 0.0
    %528 = vmatprep.subr.mxu0 0.0
    %529 = vmatpush1.msra.mxu0 0.0
    %530 = vmatprep.subr.mxu0 0.0
    %531 = vmatpush1.msra.mxu0 0.0
    %532 = vmatprep.subr.mxu0 0.0
    %533 = vmatpush1.msra.mxu0 0.0
    %534 = vmatprep.subr.mxu0 0.0
    %535 = vmatpush1.msra.mxu0 0.0
    %536 = vmatprep.subr.mxu0 0.0
    %537 = vmatpush1.msra.mxu0 0.0
    %538 = vmatprep.subr.mxu0 0.0
    %539 = vmatpush1.msra.mxu0 0.0
    %540 = vmatprep.subr.mxu0 0.0
    %541 = vmatpush1.msra.mxu0 0.0
    %542 = vmatprep.subr.mxu0 0.0
    %543 = vmatpush1.msra.mxu0 0.0
    %544 = vmatprep.subr.mxu0 0.0
    %545 = vmatpush1.msra.mxu0 0.0
    %546 = vmatprep.subr.mxu0 0.0
    %547 = vmatpush1.msra.mxu0 %v253
    %548 = vmatprep.subr.mxu0 0.0
    %549 = vmatpush1.msra.mxu0 %v248
    %550 = vmatprep.subr.mxu0 0.0
    %551 = vmatpush2.msra.mxu0 0.0
    %552 = vmatprep.subr.mxu0 0.0
    %553 = vmatpush2.msra.mxu0 0.0
    %554 = vmatprep.subr.mxu0 0.0
    %555 = vmatpush2.msra.mxu0 0.0
    %556 = vmatprep.subr.mxu0 0.0
    %557 = vmatpush2.msra.mxu0 0.0
    %558 = vmatprep.subr.mxu0 0.0
    %559 = vmatpush2.msra.mxu0 0.0
    %560 = vmatprep.subr.mxu0 0.0
    %561 = vmatpush2.msra.mxu0 0.0
    %562 = vmatprep.subr.mxu0 0.0
    %563 = vmatpush2.msra.mxu0 0.0
    %564 = vmatprep.subr.mxu0 0.0
    %565 = vmatpush2.msra.mxu0 0.0
    %566 = vmatprep.subr.mxu0 0.0
    %567 = vmatpush2.msra.mxu0 0.0
    %568 = vmatprep.subr.mxu0 0.0
    %569 = vmatpush2.msra.mxu0 0.0
    %570 = vmatprep.subr.mxu0 0.0
    %571 = vmatpush2.msra.mxu0 0.0
    %572 = vmatprep.subr.mxu0 0.0
    %573 = vmatpush2.msra.mxu0 0.0
    %574 = vmatprep.subr.mxu0 0.0
    %575 = vmatpush2.msra.mxu0 0.0
    %576 = vmatprep.subr.mxu0 0.0
    %577 = vmatpush2.msra.mxu0 0.0
    %578 = vmatprep.subr.mxu0 0.0
    %579 = vmatpush2.msra.mxu0 0.0
    %580 = vmatprep.subr.mxu0 0.0
    %581 = vmatpush2.msra.mxu0 0.0
    %582 = vmatprep.mubr.f32.mxu0 0.0
    %583 = vmatmul.mubr.f32.gmra.mxu0 %v495
    %v584 = vpop.f32.mrf.mxu0
    %v585 = vadd.f32 %v456, %v584
    %v586 = vpop.f32.mrf.mxu0
    %587 = vmatprep.mubr.f32.mxu0 0.0
    %588 = vmatmul.mubr.f32.gmra.mxu0 %v498
    %v589 = vpop.f32.mrf.mxu0
    %v590 = vadd.f32 %v461, %v589
    %v591 = vpop.f32.mrf.mxu0
    %592 = vmatprep.mubr.f32.mxu0 0.0
    %593 = vmatmul.mubr.f32.gmra.mxu0 %v501
    %v594 = vpop.f32.mrf.mxu0
    %v595 = vadd.f32 %v466, %v594
    %v596 = vpop.f32.mrf.mxu0
    %597 = vmatprep.mubr.f32.mxu0 0.0
    %598 = vmatmul.mubr.f32.gmra.mxu0 %v504
    %v599 = vpop.f32.mrf.mxu0
    %v600 = vadd.f32 %v471, %v599
    %v601 = vpop.f32.mrf.mxu0
    %602 = vmatprep.mubr.f32.mxu0 0.0
    %603 = vmatmul.mubr.f32.gmra.mxu0 %v507
    %v604 = vpop.f32.mrf.mxu0
    %v605 = vadd.f32 %v476, %v604
    %v606 = vpop.f32.mrf.mxu0
    %607 = vmatprep.mubr.f32.mxu0 0.0
    %608 = vmatmul.mubr.f32.gmra.mxu0 %v510
    %v609 = vpop.f32.mrf.mxu0
    %v610 = vadd.f32 %v481, %v609
    %v611 = vpop.f32.mrf.mxu0
    %612 = vmatprep.mubr.f32.mxu0 0.0
    %613 = vmatmul.mubr.f32.gmra.mxu0 %v513
    %v614 = vpop.f32.mrf.mxu0
    %v615 = vadd.f32 %v486, %v614
    %v616 = vpop.f32.mrf.mxu0
    %617 = vmatprep.mubr.f32.mxu0 0.0
    %618 = vmatmul.mubr.f32.gmra.mxu0 %v516
    %v619 = vpop.f32.mrf.mxu0
    %v620 = vadd.f32 %v491, %v619
    %v621 = vpop.f32.mrf.mxu0
    %622 = vdwg.mxu0
    %v623 = vlaneseq
    %v624 = vshrl.u32 %v623, 7
    %v625 = vsub.s32 0, %v624
    %v626 = vrot.slane %v363, %v625
    %v627 = vadd.f32 %v585, %v626
    %v628 = vadd.f32 %v590, %v626
    %v629 = vadd.f32 %v595, %v626
    %v630 = vadd.f32 %v600, %v626
    %v631 = vadd.f32 %v605, %v626
    %v632 = vadd.f32 %v610, %v626
    %v633 = vadd.f32 %v615, %v626
    %v634 = vadd.f32 %v620, %v626
    %v635 = vld [vmem:[#allocation4 + $0x266] sm:$0xff]
    %v636 = vld [vmem:[#allocation4 + $0x26e] sm:$0xff]
    %v637 = vld [vmem:[#allocation4 + $0x276] sm:$0xff]
    %v638 = vld [vmem:[#allocation4 + $0x27e] sm:$0xff]
    %vm639 = vcmask 261120
    %v641 = vsel %vm639, 0.0, 0
    %643 = vmatprep.subr.mxu0 0.0
    %644 = vmatpush1.msra.mxu0 0.0
    %645 = vmatprep.subr.mxu0 0.0
    %646 = vmatpush1.msra.mxu0 0.0
    %647 = vmatprep.subr.mxu0 0.0
    %648 = vmatpush1.msra.mxu0 0.0
    %649 = vmatprep.subr.mxu0 0.0
    %650 = vmatpush1.msra.mxu0 0.0
    %651 = vmatprep.subr.mxu0 0.0
    %652 = vmatpush1.msra.mxu0 0.0
    %653 = vmatprep.subr.mxu0 0.0
    %654 = vmatpush1.msra.mxu0 0.0
    %655 = vmatprep.subr.mxu0 0.0
    %656 = vmatpush1.msra.mxu0 0.0
    %657 = vmatprep.subr.mxu0 0.0
    %658 = vmatpush1.msra.mxu0 0.0
    %659 = vmatprep.subr.mxu0 0.0
    %660 = vmatpush1.msra.mxu0 0.0
    %661 = vmatprep.subr.mxu0 0.0
    %662 = vmatpush1.msra.mxu0 0.0
    %663 = vmatprep.subr.mxu0 0.0
    %664 = vmatpush1.msra.mxu0 0.0
    %665 = vmatprep.subr.mxu0 0.0
    %666 = vmatpush1.msra.mxu0 0.0
    %667 = vmatprep.subr.mxu0 0.0
    %668 = vmatpush1.msra.mxu0 %v638
    %669 = vmatprep.subr.mxu0 0.0
    %670 = vmatpush1.msra.mxu0 %v637
    %671 = vmatprep.subr.mxu0 0.0
    %672 = vmatpush1.msra.mxu0 %v636
    %673 = vmatprep.subr.mxu0 0.0
    %674 = vmatpush1.msra.mxu0 %v635
    %675 = vmatprep.subr.mxu0 0.0
    %676 = vmatpush2.msra.mxu0 0.0
    %677 = vmatprep.subr.mxu0 0.0
    %678 = vmatpush2.msra.mxu0 0.0
    %679 = vmatprep.subr.mxu0 0.0
    %680 = vmatpush2.msra.mxu0 0.0
    %681 = vmatprep.subr.mxu0 0.0
    %682 = vmatpush2.msra.mxu0 0.0
    %683 = vmatprep.subr.mxu0 0.0
    %684 = vmatpush2.msra.mxu0 0.0
    %685 = vmatprep.subr.mxu0 0.0
    %686 = vmatpush2.msra.mxu0 0.0
    %687 = vmatprep.subr.mxu0 0.0
    %688 = vmatpush2.msra.mxu0 0.0
    %689 = vmatprep.subr.mxu0 0.0
    %690 = vmatpush2.msra.mxu0 0.0
    %691 = vmatprep.subr.mxu0 0.0
    %692 = vmatpush2.msra.mxu0 0.0
    %693 = vmatprep.subr.mxu0 0.0
    %694 = vmatpush2.msra.mxu0 0.0
    %695 = vmatprep.subr.mxu0 0.0
    %696 = vmatpush2.msra.mxu0 0.0
    %697 = vmatprep.subr.mxu0 0.0
    %698 = vmatpush2.msra.mxu0 0.0
    %699 = vmatprep.subr.mxu0 0.0
    %700 = vmatpush2.msra.mxu0 0.0
    %701 = vmatprep.subr.mxu0 0.0
    %702 = vmatpush2.msra.mxu0 0.0
    %703 = vmatprep.subr.mxu0 0.0
    %704 = vmatpush2.msra.mxu0 0.0
    %705 = vmatprep.subr.mxu0 0.0
    %706 = vmatpush2.msra.mxu0 0.0
    %707 = vmatprep.mubr.f32.mxu0 0.0
    %708 = vmatmul.mubr.f32.gmra.mxu0 %v641
    %v709 = vpop.f32.mrf.mxu0
    %v710 = vadd.f32 0.0, %v709
    %v711 = vpop.f32.mrf.mxu0
    %712 = vdwg.mxu0
    %v713 = vadd.f32 %v627, %v710
    %v714 = vxor.u32 %v713, 2147483648
    %v715 = vmul.f32 %v714, 1.442695
    %v716 = vpow.pop %v715
    %v717 = vadd.f32 %v716, 1.0
    %v718 = vrcp.pop %v717
    %v719 = vmul.f32 1.0, %v718
    %v720 = vtanh.pop %v713
    %v721 = vmul.f32 %v719, 0.0
    %723 = vrot.lane.b32.xlu0 %v720, 64
    %v724 = vpop.permute.xlu0 %723
    %v726 = vmul.f32 %v719, %v724
    %728 = vrot.lane.b32.xlu0 %v726, 32
    %v729 = vpop.permute.xlu0 %728
    %v731 = vadd.f32 %v721, %v729
    %v732 = vtanh.pop %v731
    %734 = vrot.lane.b32.xlu0 %v732, 64
    %v735 = vpop.permute.xlu0 %734
    %v737 = vmul.f32 %v719, %v735
    %739 = vrot.lane.b32.xlu0 %v737, 32
    %v740 = vpop.permute.xlu0 %739
    %v741 = vsel %vm639, %v740, 0
    %743 = vmatprep.subr.mxu0 0.0
    %744 = vmatpush1.msra.mxu0 0.0
    %745 = vmatprep.subr.mxu0 0.0
    %746 = vmatpush1.msra.mxu0 0.0
    %747 = vmatprep.subr.mxu0 0.0
    %748 = vmatpush1.msra.mxu0 0.0
    %749 = vmatprep.subr.mxu0 0.0
    %750 = vmatpush1.msra.mxu0 0.0
    %751 = vmatprep.subr.mxu0 0.0
    %752 = vmatpush1.msra.mxu0 0.0
    %753 = vmatprep.subr.mxu0 0.0
    %754 = vmatpush1.msra.mxu0 0.0
    %755 = vmatprep.subr.mxu0 0.0
    %756 = vmatpush1.msra.mxu0 0.0
    %757 = vmatprep.subr.mxu0 0.0
    %758 = vmatpush1.msra.mxu0 0.0
    %759 = vmatprep.subr.mxu0 0.0
    %760 = vmatpush1.msra.mxu0 0.0
    %761 = vmatprep.subr.mxu0 0.0
    %762 = vmatpush1.msra.mxu0 0.0
    %763 = vmatprep.subr.mxu0 0.0
    %764 = vmatpush1.msra.mxu0 0.0
    %765 = vmatprep.subr.mxu0 0.0
    %766 = vmatpush1.msra.mxu0 0.0
    %767 = vmatprep.subr.mxu0 0.0
    %768 = vmatpush1.msra.mxu0 %v638
    %769 = vmatprep.subr.mxu0 0.0
    %770 = vmatpush1.msra.mxu0 %v637
    %771 = vmatprep.subr.mxu0 0.0
    %772 = vmatpush1.msra.mxu0 %v636
    %773 = vmatprep.subr.mxu0 0.0
    %774 = vmatpush1.msra.mxu0 %v635
    %775 = vmatprep.subr.mxu0 0.0
    %776 = vmatpush2.msra.mxu0 0.0
    %777 = vmatprep.subr.mxu0 0.0
    %778 = vmatpush2.msra.mxu0 0.0
    %779 = vmatprep.subr.mxu0 0.0
    %780 = vmatpush2.msra.mxu0 0.0
    %781 = vmatprep.subr.mxu0 0.0
    %782 = vmatpush2.msra.mxu0 0.0
    %783 = vmatprep.subr.mxu0 0.0
    %784 = vmatpush2.msra.mxu0 0.0
    %785 = vmatprep.subr.mxu0 0.0
    %786 = vmatpush2.msra.mxu0 0.0
    %787 = vmatprep.subr.mxu0 0.0
    %788 = vmatpush2.msra.mxu0 0.0
    %789 = vmatprep.subr.mxu0 0.0
    %790 = vmatpush2.msra.mxu0 0.0
    %791 = vmatprep.subr.mxu0 0.0
    %792 = vmatpush2.msra.mxu0 0.0
    %793 = vmatprep.subr.mxu0 0.0
    %794 = vmatpush2.msra.mxu0 0.0
    %795 = vmatprep.subr.mxu0 0.0
    %796 = vmatpush2.msra.mxu0 0.0
    %797 = vmatprep.subr.mxu0 0.0
    %798 = vmatpush2.msra.mxu0 0.0
    %799 = vmatprep.subr.mxu0 0.0
    %800 = vmatpush2.msra.mxu0 0.0
    %801 = vmatprep.subr.mxu0 0.0
    %802 = vmatpush2.msra.mxu0 0.0
    %803 = vmatprep.subr.mxu0 0.0
    %804 = vmatpush2.msra.mxu0 0.0
    %805 = vmatprep.subr.mxu0 0.0
    %806 = vmatpush2.msra.mxu0 0.0
    %807 = vmatprep.mubr.f32.mxu0 0.0
    %808 = vmatmul.mubr.f32.gmra.mxu0 %v741
    %v809 = vpop.f32.mrf.mxu0
    %v810 = vadd.f32 0.0, %v809
    %v811 = vpop.f32.mrf.mxu0
    %812 = vdwg.mxu0
    %v813 = vadd.f32 %v628, %v810
    %v814 = vxor.u32 %v813, 2147483648
    %v815 = vmul.f32 %v814, 1.442695
    %v816 = vpow.pop %v815
    %v817 = vadd.f32 %v816, 1.0
    %v818 = vrcp.pop %v817
    %v819 = vmul.f32 1.0, %v818
    %v820 = vtanh.pop %v813
    %v821 = vmul.f32 %v819, %v731
    %823 = vrot.lane.b32.xlu0 %v820, 64
    %v824 = vpop.permute.xlu0 %823
    %v826 = vmul.f32 %v819, %v824
    %828 = vrot.lane.b32.xlu0 %v826, 32
    %v829 = vpop.permute.xlu0 %828
    %v831 = vadd.f32 %v821, %v829
    %v832 = vtanh.pop %v831
    %834 = vrot.lane.b32.xlu0 %v832, 64
    %v835 = vpop.permute.xlu0 %834
    %v837 = vmul.f32 %v819, %v835
    %839 = vrot.lane.b32.xlu0 %v837, 32
    %v840 = vpop.permute.xlu0 %839
    %v841 = vsel %vm639, %v840, 0
    %843 = vmatprep.subr.mxu0 0.0
    %844 = vmatpush1.msra.mxu0 0.0
    %845 = vmatprep.subr.mxu0 0.0
    %846 = vmatpush1.msra.mxu0 0.0
    %847 = vmatprep.subr.mxu0 0.0
    %848 = vmatpush1.msra.mxu0 0.0
    %849 = vmatprep.subr.mxu0 0.0
    %850 = vmatpush1.msra.mxu0 0.0
    %851 = vmatprep.subr.mxu0 0.0
    %852 = vmatpush1.msra.mxu0 0.0
    %853 = vmatprep.subr.mxu0 0.0
    %854 = vmatpush1.msra.mxu0 0.0
    %855 = vmatprep.subr.mxu0 0.0
    %856 = vmatpush1.msra.mxu0 0.0
    %857 = vmatprep.subr.mxu0 0.0
    %858 = vmatpush1.msra.mxu0 0.0
    %859 = vmatprep.subr.mxu0 0.0
    %860 = vmatpush1.msra.mxu0 0.0
    %861 = vmatprep.subr.mxu0 0.0
    %862 = vmatpush1.msra.mxu0 0.0
    %863 = vmatprep.subr.mxu0 0.0
    %864 = vmatpush1.msra.mxu0 0.0
    %865 = vmatprep.subr.mxu0 0.0
    %866 = vmatpush1.msra.mxu0 0.0
    %867 = vmatprep.subr.mxu0 0.0
    %868 = vmatpush1.msra.mxu0 %v638
    %869 = vmatprep.subr.mxu0 0.0
    %870 = vmatpush1.msra.mxu0 %v637
    %871 = vmatprep.subr.mxu0 0.0
    %872 = vmatpush1.msra.mxu0 %v636
    %873 = vmatprep.subr.mxu0 0.0
    %874 = vmatpush1.msra.mxu0 %v635
    %875 = vmatprep.subr.mxu0 0.0
    %876 = vmatpush2.msra.mxu0 0.0
    %877 = vmatprep.subr.mxu0 0.0
    %878 = vmatpush2.msra.mxu0 0.0
    %879 = vmatprep.subr.mxu0 0.0
    %880 = vmatpush2.msra.mxu0 0.0
    %881 = vmatprep.subr.mxu0 0.0
    %882 = vmatpush2.msra.mxu0 0.0
    %883 = vmatprep.subr.mxu0 0.0
    %884 = vmatpush2.msra.mxu0 0.0
    %885 = vmatprep.subr.mxu0 0.0
    %886 = vmatpush2.msra.mxu0 0.0
    %887 = vmatprep.subr.mxu0 0.0
    %888 = vmatpush2.msra.mxu0 0.0
    %889 = vmatprep.subr.mxu0 0.0
    %890 = vmatpush2.msra.mxu0 0.0
    %891 = vmatprep.subr.mxu0 0.0
    %892 = vmatpush2.msra.mxu0 0.0
    %893 = vmatprep.subr.mxu0 0.0
    %894 = vmatpush2.msra.mxu0 0.0
    %895 = vmatprep.subr.mxu0 0.0
    %896 = vmatpush2.msra.mxu0 0.0
    %897 = vmatprep.subr.mxu0 0.0
    %898 = vmatpush2.msra.mxu0 0.0
    %899 = vmatprep.subr.mxu0 0.0
    %900 = vmatpush2.msra.mxu0 0.0
    %901 = vmatprep.subr.mxu0 0.0
    %902 = vmatpush2.msra.mxu0 0.0
    %903 = vmatprep.subr.mxu0 0.0
    %904 = vmatpush2.msra.mxu0 0.0
    %905 = vmatprep.subr.mxu0 0.0
    %906 = vmatpush2.msra.mxu0 0.0
    %907 = vmatprep.mubr.f32.mxu0 0.0
    %908 = vmatmul.mubr.f32.gmra.mxu0 %v841
    %v909 = vpop.f32.mrf.mxu0
    %v910 = vadd.f32 0.0, %v909
    %v911 = vpop.f32.mrf.mxu0
    %912 = vdwg.mxu0
    %v913 = vadd.f32 %v629, %v910
    %v914 = vxor.u32 %v913, 2147483648
    %v915 = vmul.f32 %v914, 1.442695
    %v916 = vpow.pop %v915
    %v917 = vadd.f32 %v916, 1.0
    %v918 = vrcp.pop %v917
    %v919 = vmul.f32 1.0, %v918
    %v920 = vtanh.pop %v913
    %v921 = vmul.f32 %v919, %v831
    %923 = vrot.lane.b32.xlu0 %v920, 64
    %v924 = vpop.permute.xlu0 %923
    %v926 = vmul.f32 %v919, %v924
    %928 = vrot.lane.b32.xlu0 %v926, 32
    %v929 = vpop.permute.xlu0 %928
    %v931 = vadd.f32 %v921, %v929
    %v932 = vtanh.pop %v931
    %934 = vrot.lane.b32.xlu0 %v932, 64
    %v935 = vpop.permute.xlu0 %934
    %v937 = vmul.f32 %v919, %v935
    %939 = vrot.lane.b32.xlu0 %v937, 32
    %v940 = vpop.permute.xlu0 %939
    %v941 = vsel %vm639, %v940, 0
    %943 = vmatprep.subr.mxu0 0.0
    %944 = vmatpush1.msra.mxu0 0.0
    %945 = vmatprep.subr.mxu0 0.0
    %946 = vmatpush1.msra.mxu0 0.0
    %947 = vmatprep.subr.mxu0 0.0
    %948 = vmatpush1.msra.mxu0 0.0
    %949 = vmatprep.subr.mxu0 0.0
    %950 = vmatpush1.msra.mxu0 0.0
    %951 = vmatprep.subr.mxu0 0.0
    %952 = vmatpush1.msra.mxu0 0.0
    %953 = vmatprep.subr.mxu0 0.0
    %954 = vmatpush1.msra.mxu0 0.0
    %955 = vmatprep.subr.mxu0 0.0
    %956 = vmatpush1.msra.mxu0 0.0
    %957 = vmatprep.subr.mxu0 0.0
    %958 = vmatpush1.msra.mxu0 0.0
    %959 = vmatprep.subr.mxu0 0.0
    %960 = vmatpush1.msra.mxu0 0.0
    %961 = vmatprep.subr.mxu0 0.0
    %962 = vmatpush1.msra.mxu0 0.0
    %963 = vmatprep.subr.mxu0 0.0
    %964 = vmatpush1.msra.mxu0 0.0
    %965 = vmatprep.subr.mxu0 0.0
    %966 = vmatpush1.msra.mxu0 0.0
    %967 = vmatprep.subr.mxu0 0.0
    %968 = vmatpush1.msra.mxu0 %v638
    %969 = vmatprep.subr.mxu0 0.0
    %970 = vmatpush1.msra.mxu0 %v637
    %971 = vmatprep.subr.mxu0 0.0
    %972 = vmatpush1.msra.mxu0 %v636
    %973 = vmatprep.subr.mxu0 0.0
    %974 = vmatpush1.msra.mxu0 %v635
    %975 = vmatprep.subr.mxu0 0.0
    %976 = vmatpush2.msra.mxu0 0.0
    %977 = vmatprep.subr.mxu0 0.0
    %978 = vmatpush2.msra.mxu0 0.0
    %979 = vmatprep.subr.mxu0 0.0
    %980 = vmatpush2.msra.mxu0 0.0
    %981 = vmatprep.subr.mxu0 0.0
    %982 = vmatpush2.msra.mxu0 0.0
    %983 = vmatprep.subr.mxu0 0.0
    %984 = vmatpush2.msra.mxu0 0.0
    %985 = vmatprep.subr.mxu0 0.0
    %986 = vmatpush2.msra.mxu0 0.0
    %987 = vmatprep.subr.mxu0 0.0
    %988 = vmatpush2.msra.mxu0 0.0
    %989 = vmatprep.subr.mxu0 0.0
    %990 = vmatpush2.msra.mxu0 0.0
    %991 = vmatprep.subr.mxu0 0.0
    %992 = vmatpush2.msra.mxu0 0.0
    %993 = vmatprep.subr.mxu0 0.0
    %994 = vmatpush2.msra.mxu0 0.0
    %995 = vmatprep.subr.mxu0 0.0
    %996 = vmatpush2.msra.mxu0 0.0
    %997 = vmatprep.subr.mxu0 0.0
    %998 = vmatpush2.msra.mxu0 0.0
    %999 = vmatprep.subr.mxu0 0.0
    %1000 = vmatpush2.msra.mxu0 0.0
    %1001 = vmatprep.subr.mxu0 0.0
    %1002 = vmatpush2.msra.mxu0 0.0
    %1003 = vmatprep.subr.mxu0 0.0
    %1004 = vmatpush2.msra.mxu0 0.0
    %1005 = vmatprep.subr.mxu0 0.0
    %1006 = vmatpush2.msra.mxu0 0.0
    %1007 = vmatprep.mubr.f32.mxu0 0.0
    %1008 = vmatmul.mubr.f32.gmra.mxu0 %v941
    %v1009 = vpop.f32.mrf.mxu0
    %v1010 = vadd.f32 0.0, %v1009
    %v1011 = vpop.f32.mrf.mxu0
    %1012 = vdwg.mxu0
    %v1013 = vadd.f32 %v630, %v1010
    %v1014 = vxor.u32 %v1013, 2147483648
    %v1015 = vmul.f32 %v1014, 1.442695
    %v1016 = vpow.pop %v1015
    %v1017 = vadd.f32 %v1016, 1.0
    %v1018 = vrcp.pop %v1017
    %v1019 = vmul.f32 1.0, %v1018
    %v1020 = vtanh.pop %v1013
    %v1021 = vmul.f32 %v1019, %v931
    %1023 = vrot.lane.b32.xlu0 %v1020, 64
    %v1024 = vpop.permute.xlu0 %1023
    %v1026 = vmul.f32 %v1019, %v1024
    %1028 = vrot.lane.b32.xlu0 %v1026, 32
    %v1029 = vpop.permute.xlu0 %1028
    %v1031 = vadd.f32 %v1021, %v1029
    %v1032 = vtanh.pop %v1031
    %1034 = vrot.lane.b32.xlu0 %v1032, 64
    %v1035 = vpop.permute.xlu0 %1034
    %v1037 = vmul.f32 %v1019, %v1035
    %1039 = vrot.lane.b32.xlu0 %v1037, 32
    %v1040 = vpop.permute.xlu0 %1039
    %v1041 = vsel %vm639, %v1040, 0
    %1043 = vmatprep.subr.mxu0 0.0
    %1044 = vmatpush1.msra.mxu0 0.0
    %1045 = vmatprep.subr.mxu0 0.0
    %1046 = vmatpush1.msra.mxu0 0.0
    %1047 = vmatprep.subr.mxu0 0.0
    %1048 = vmatpush1.msra.mxu0 0.0
    %1049 = vmatprep.subr.mxu0 0.0
    %1050 = vmatpush1.msra.mxu0 0.0
    %1051 = vmatprep.subr.mxu0 0.0
    %1052 = vmatpush1.msra.mxu0 0.0
    %1053 = vmatprep.subr.mxu0 0.0
    %1054 = vmatpush1.msra.mxu0 0.0
    %1055 = vmatprep.subr.mxu0 0.0
    %1056 = vmatpush1.msra.mxu0 0.0
    %1057 = vmatprep.subr.mxu0 0.0
    %1058 = vmatpush1.msra.mxu0 0.0
    %1059 = vmatprep.subr.mxu0 0.0
    %1060 = vmatpush1.msra.mxu0 0.0
    %1061 = vmatprep.subr.mxu0 0.0
    %1062 = vmatpush1.msra.mxu0 0.0
    %1063 = vmatprep.subr.mxu0 0.0
    %1064 = vmatpush1.msra.mxu0 0.0
    %1065 = vmatprep.subr.mxu0 0.0
    %1066 = vmatpush1.msra.mxu0 0.0
    %1067 = vmatprep.subr.mxu0 0.0
    %1068 = vmatpush1.msra.mxu0 %v638
    %1069 = vmatprep.subr.mxu0 0.0
    %1070 = vmatpush1.msra.mxu0 %v637
    %1071 = vmatprep.subr.mxu0 0.0
    %1072 = vmatpush1.msra.mxu0 %v636
    %1073 = vmatprep.subr.mxu0 0.0
    %1074 = vmatpush1.msra.mxu0 %v635
    %1075 = vmatprep.subr.mxu0 0.0
    %1076 = vmatpush2.msra.mxu0 0.0
    %1077 = vmatprep.subr.mxu0 0.0
    %1078 = vmatpush2.msra.mxu0 0.0
    %1079 = vmatprep.subr.mxu0 0.0
    %1080 = vmatpush2.msra.mxu0 0.0
    %1081 = vmatprep.subr.mxu0 0.0
    %1082 = vmatpush2.msra.mxu0 0.0
    %1083 = vmatprep.subr.mxu0 0.0
    %1084 = vmatpush2.msra.mxu0 0.0
    %1085 = vmatprep.subr.mxu0 0.0
    %1086 = vmatpush2.msra.mxu0 0.0
    %1087 = vmatprep.subr.mxu0 0.0
    %1088 = vmatpush2.msra.mxu0 0.0
    %1089 = vmatprep.subr.mxu0 0.0
    %1090 = vmatpush2.msra.mxu0 0.0
    %1091 = vmatprep.subr.mxu0 0.0
    %1092 = vmatpush2.msra.mxu0 0.0
    %1093 = vmatprep.subr.mxu0 0.0
    %1094 = vmatpush2.msra.mxu0 0.0
    %1095 = vmatprep.subr.mxu0 0.0
    %1096 = vmatpush2.msra.mxu0 0.0
    %1097 = vmatprep.subr.mxu0 0.0
    %1098 = vmatpush2.msra.mxu0 0.0
    %1099 = vmatprep.subr.mxu0 0.0
    %1100 = vmatpush2.msra.mxu0 0.0
    %1101 = vmatprep.subr.mxu0 0.0
    %1102 = vmatpush2.msra.mxu0 0.0
    %1103 = vmatprep.subr.mxu0 0.0
    %1104 = vmatpush2.msra.mxu0 0.0
    %1105 = vmatprep.subr.mxu0 0.0
    %1106 = vmatpush2.msra.mxu0 0.0
    %1107 = vmatprep.mubr.f32.mxu0 0.0
    %1108 = vmatmul.mubr.f32.gmra.mxu0 %v1041
    %v1109 = vpop.f32.mrf.mxu0
    %v1110 = vadd.f32 0.0, %v1109
    %v1111 = vpop.f32.mrf.mxu0
    %1112 = vdwg.mxu0
    %v1113 = vadd.f32 %v631, %v1110
    %v1114 = vxor.u32 %v1113, 2147483648
    %v1115 = vmul.f32 %v1114, 1.442695
    %v1116 = vpow.pop %v1115
    %v1117 = vadd.f32 %v1116, 1.0
    %v1118 = vrcp.pop %v1117
    %v1119 = vmul.f32 1.0, %v1118
    %v1120 = vtanh.pop %v1113
    %v1121 = vmul.f32 %v1119, %v1031
    %1123 = vrot.lane.b32.xlu0 %v1120, 64
    %v1124 = vpop.permute.xlu0 %1123
    %v1126 = vmul.f32 %v1119, %v1124
    %1128 = vrot.lane.b32.xlu0 %v1126, 32
    %v1129 = vpop.permute.xlu0 %1128
    %v1131 = vadd.f32 %v1121, %v1129
    %v1132 = vtanh.pop %v1131
    %1134 = vrot.lane.b32.xlu0 %v1132, 64
    %v1135 = vpop.permute.xlu0 %1134
    %v1137 = vmul.f32 %v1119, %v1135
    %1139 = vrot.lane.b32.xlu0 %v1137, 32
    %v1140 = vpop.permute.xlu0 %1139
    %v1141 = vsel %vm639, %v1140, 0
    %1143 = vmatprep.subr.mxu0 0.0
    %1144 = vmatpush1.msra.mxu0 0.0
    %1145 = vmatprep.subr.mxu0 0.0
    %1146 = vmatpush1.msra.mxu0 0.0
    %1147 = vmatprep.subr.mxu0 0.0
    %1148 = vmatpush1.msra.mxu0 0.0
    %1149 = vmatprep.subr.mxu0 0.0
    %1150 = vmatpush1.msra.mxu0 0.0
    %1151 = vmatprep.subr.mxu0 0.0
    %1152 = vmatpush1.msra.mxu0 0.0
    %1153 = vmatprep.subr.mxu0 0.0
    %1154 = vmatpush1.msra.mxu0 0.0
    %1155 = vmatprep.subr.mxu0 0.0
    %1156 = vmatpush1.msra.mxu0 0.0
    %1157 = vmatprep.subr.mxu0 0.0
    %1158 = vmatpush1.msra.mxu0 0.0
    %1159 = vmatprep.subr.mxu0 0.0
    %1160 = vmatpush1.msra.mxu0 0.0
    %1161 = vmatprep.subr.mxu0 0.0
    %1162 = vmatpush1.msra.mxu0 0.0
    %1163 = vmatprep.subr.mxu0 0.0
    %1164 = vmatpush1.msra.mxu0 0.0
    %1165 = vmatprep.subr.mxu0 0.0
    %1166 = vmatpush1.msra.mxu0 0.0
    %1167 = vmatprep.subr.mxu0 0.0
    %1168 = vmatpush1.msra.mxu0 %v638
    %1169 = vmatprep.subr.mxu0 0.0
    %1170 = vmatpush1.msra.mxu0 %v637
    %1171 = vmatprep.subr.mxu0 0.0
    %1172 = vmatpush1.msra.mxu0 %v636
    %1173 = vmatprep.subr.mxu0 0.0
    %1174 = vmatpush1.msra.mxu0 %v635
    %1175 = vmatprep.subr.mxu0 0.0
    %1176 = vmatpush2.msra.mxu0 0.0
    %1177 = vmatprep.subr.mxu0 0.0
    %1178 = vmatpush2.msra.mxu0 0.0
    %1179 = vmatprep.subr.mxu0 0.0
    %1180 = vmatpush2.msra.mxu0 0.0
    %1181 = vmatprep.subr.mxu0 0.0
    %1182 = vmatpush2.msra.mxu0 0.0
    %1183 = vmatprep.subr.mxu0 0.0
    %1184 = vmatpush2.msra.mxu0 0.0
    %1185 = vmatprep.subr.mxu0 0.0
    %1186 = vmatpush2.msra.mxu0 0.0
    %1187 = vmatprep.subr.mxu0 0.0
    %1188 = vmatpush2.msra.mxu0 0.0
    %1189 = vmatprep.subr.mxu0 0.0
    %1190 = vmatpush2.msra.mxu0 0.0
    %1191 = vmatprep.subr.mxu0 0.0
    %1192 = vmatpush2.msra.mxu0 0.0
    %1193 = vmatprep.subr.mxu0 0.0
    %1194 = vmatpush2.msra.mxu0 0.0
    %1195 = vmatprep.subr.mxu0 0.0
    %1196 = vmatpush2.msra.mxu0 0.0
    %1197 = vmatprep.subr.mxu0 0.0
    %1198 = vmatpush2.msra.mxu0 0.0
    %1199 = vmatprep.subr.mxu0 0.0
    %1200 = vmatpush2.msra.mxu0 0.0
    %1201 = vmatprep.subr.mxu0 0.0
    %1202 = vmatpush2.msra.mxu0 0.0
    %1203 = vmatprep.subr.mxu0 0.0
    %1204 = vmatpush2.msra.mxu0 0.0
    %1205 = vmatprep.subr.mxu0 0.0
    %1206 = vmatpush2.msra.mxu0 0.0
    %1207 = vmatprep.mubr.f32.mxu0 0.0
    %1208 = vmatmul.mubr.f32.gmra.mxu0 %v1141
    %v1209 = vpop.f32.mrf.mxu0
    %v1210 = vadd.f32 0.0, %v1209
    %v1211 = vpop.f32.mrf.mxu0
    %1212 = vdwg.mxu0
    %v1213 = vadd.f32 %v632, %v1210
    %v1214 = vxor.u32 %v1213, 2147483648
    %v1215 = vmul.f32 %v1214, 1.442695
    %v1216 = vpow.pop %v1215
    %v1217 = vadd.f32 %v1216, 1.0
    %v1218 = vrcp.pop %v1217
    %v1219 = vmul.f32 1.0, %v1218
    %v1220 = vtanh.pop %v1213
    %v1221 = vmul.f32 %v1219, %v1131
    %1223 = vrot.lane.b32.xlu0 %v1220, 64
    %v1224 = vpop.permute.xlu0 %1223
    %v1226 = vmul.f32 %v1219, %v1224
    %1228 = vrot.lane.b32.xlu0 %v1226, 32
    %v1229 = vpop.permute.xlu0 %1228
    %v1231 = vadd.f32 %v1221, %v1229
    %v1232 = vtanh.pop %v1231
    %1234 = vrot.lane.b32.xlu0 %v1232, 64
    %v1235 = vpop.permute.xlu0 %1234
    %v1237 = vmul.f32 %v1219, %v1235
    %1239 = vrot.lane.b32.xlu0 %v1237, 32
    %v1240 = vpop.permute.xlu0 %1239
    %v1241 = vsel %vm639, %v1240, 0
    %1243 = vmatprep.subr.mxu0 0.0
    %1244 = vmatpush1.msra.mxu0 0.0
    %1245 = vmatprep.subr.mxu0 0.0
    %1246 = vmatpush1.msra.mxu0 0.0
    %1247 = vmatprep.subr.mxu0 0.0
    %1248 = vmatpush1.msra.mxu0 0.0
    %1249 = vmatprep.subr.mxu0 0.0
    %1250 = vmatpush1.msra.mxu0 0.0
    %1251 = vmatprep.subr.mxu0 0.0
    %1252 = vmatpush1.msra.mxu0 0.0
    %1253 = vmatprep.subr.mxu0 0.0
    %1254 = vmatpush1.msra.mxu0 0.0
    %1255 = vmatprep.subr.mxu0 0.0
    %1256 = vmatpush1.msra.mxu0 0.0
    %1257 = vmatprep.subr.mxu0 0.0
    %1258 = vmatpush1.msra.mxu0 0.0
    %1259 = vmatprep.subr.mxu0 0.0
    %1260 = vmatpush1.msra.mxu0 0.0
    %1261 = vmatprep.subr.mxu0 0.0
    %1262 = vmatpush1.msra.mxu0 0.0
    %1263 = vmatprep.subr.mxu0 0.0
    %1264 = vmatpush1.msra.mxu0 0.0
    %1265 = vmatprep.subr.mxu0 0.0
    %1266 = vmatpush1.msra.mxu0 0.0
    %1267 = vmatprep.subr.mxu0 0.0
    %1268 = vmatpush1.msra.mxu0 %v638
    %1269 = vmatprep.subr.mxu0 0.0
    %1270 = vmatpush1.msra.mxu0 %v637
    %1271 = vmatprep.subr.mxu0 0.0
    %1272 = vmatpush1.msra.mxu0 %v636
    %1273 = vmatprep.subr.mxu0 0.0
    %1274 = vmatpush1.msra.mxu0 %v635
    %1275 = vmatprep.subr.mxu0 0.0
    %1276 = vmatpush2.msra.mxu0 0.0
    %1277 = vmatprep.subr.mxu0 0.0
    %1278 = vmatpush2.msra.mxu0 0.0
    %1279 = vmatprep.subr.mxu0 0.0
    %1280 = vmatpush2.msra.mxu0 0.0
    %1281 = vmatprep.subr.mxu0 0.0
    %1282 = vmatpush2.msra.mxu0 0.0
    %1283 = vmatprep.subr.mxu0 0.0
    %1284 = vmatpush2.msra.mxu0 0.0
    %1285 = vmatprep.subr.mxu0 0.0
    %1286 = vmatpush2.msra.mxu0 0.0
    %1287 = vmatprep.subr.mxu0 0.0
    %1288 = vmatpush2.msra.mxu0 0.0
    %1289 = vmatprep.subr.mxu0 0.0
    %1290 = vmatpush2.msra.mxu0 0.0
    %1291 = vmatprep.subr.mxu0 0.0
    %1292 = vmatpush2.msra.mxu0 0.0
    %1293 = vmatprep.subr.mxu0 0.0
    %1294 = vmatpush2.msra.mxu0 0.0
    %1295 = vmatprep.subr.mxu0 0.0
    %1296 = vmatpush2.msra.mxu0 0.0
    %1297 = vmatprep.subr.mxu0 0.0
    %1298 = vmatpush2.msra.mxu0 0.0
    %1299 = vmatprep.subr.mxu0 0.0
    %1300 = vmatpush2.msra.mxu0 0.0
    %1301 = vmatprep.subr.mxu0 0.0
    %1302 = vmatpush2.msra.mxu0 0.0
    %1303 = vmatprep.subr.mxu0 0.0
    %1304 = vmatpush2.msra.mxu0 0.0
    %1305 = vmatprep.subr.mxu0 0.0
    %1306 = vmatpush2.msra.mxu0 0.0
    %1307 = vmatprep.mubr.f32.mxu0 0.0
    %1308 = vmatmul.mubr.f32.gmra.mxu0 %v1241
    %v1309 = vpop.f32.mrf.mxu0
    %v1310 = vadd.f32 0.0, %v1309
    %v1311 = vpop.f32.mrf.mxu0
    %1312 = vdwg.mxu0
    %v1313 = vadd.f32 %v633, %v1310
    %v1314 = vxor.u32 %v1313, 2147483648
    %v1315 = vmul.f32 %v1314, 1.442695
    %v1316 = vpow.pop %v1315
    %v1317 = vadd.f32 %v1316, 1.0
    %v1318 = vrcp.pop %v1317
    %v1319 = vmul.f32 1.0, %v1318
    %v1320 = vtanh.pop %v1313
    %v1321 = vmul.f32 %v1319, %v1231
    %1323 = vrot.lane.b32.xlu0 %v1320, 64
    %v1324 = vpop.permute.xlu0 %1323
    %v1326 = vmul.f32 %v1319, %v1324
    %1328 = vrot.lane.b32.xlu0 %v1326, 32
    %v1329 = vpop.permute.xlu0 %1328
    %v1331 = vadd.f32 %v1321, %v1329
    %v1332 = vtanh.pop %v1331
    %1334 = vrot.lane.b32.xlu0 %v1332, 64
    %v1335 = vpop.permute.xlu0 %1334
    %v1337 = vmul.f32 %v1319, %v1335
    %1339 = vrot.lane.b32.xlu0 %v1337, 32
    %v1340 = vpop.permute.xlu0 %1339
    %v1341 = vsel %vm639, %v1340, 0
    %1343 = vmatprep.subr.mxu0 0.0
    %1344 = vmatpush1.msra.mxu0 0.0
    %1345 = vmatprep.subr.mxu0 0.0
    %1346 = vmatpush1.msra.mxu0 0.0
    %1347 = vmatprep.subr.mxu0 0.0
    %1348 = vmatpush1.msra.mxu0 0.0
    %1349 = vmatprep.subr.mxu0 0.0
    %1350 = vmatpush1.msra.mxu0 0.0
    %1351 = vmatprep.subr.mxu0 0.0
    %1352 = vmatpush1.msra.mxu0 0.0
    %1353 = vmatprep.subr.mxu0 0.0
    %1354 = vmatpush1.msra.mxu0 0.0
    %1355 = vmatprep.subr.mxu0 0.0
    %1356 = vmatpush1.msra.mxu0 0.0
    %1357 = vmatprep.subr.mxu0 0.0
    %1358 = vmatpush1.msra.mxu0 0.0
    %1359 = vmatprep.subr.mxu0 0.0
    %1360 = vmatpush1.msra.mxu0 0.0
    %1361 = vmatprep.subr.mxu0 0.0
    %1362 = vmatpush1.msra.mxu0 0.0
    %1363 = vmatprep.subr.mxu0 0.0
    %1364 = vmatpush1.msra.mxu0 0.0
    %1365 = vmatprep.subr.mxu0 0.0
    %1366 = vmatpush1.msra.mxu0 0.0
    %1367 = vmatprep.subr.mxu0 0.0
    %1368 = vmatpush1.msra.mxu0 %v638
    %1369 = vmatprep.subr.mxu0 0.0
    %1370 = vmatpush1.msra.mxu0 %v637
    %1371 = vmatprep.subr.mxu0 0.0
    %1372 = vmatpush1.msra.mxu0 %v636
    %1373 = vmatprep.subr.mxu0 0.0
    %1374 = vmatpush1.msra.mxu0 %v635
    %1375 = vmatprep.subr.mxu0 0.0
    %1376 = vmatpush2.msra.mxu0 0.0
    %1377 = vmatprep.subr.mxu0 0.0
    %1378 = vmatpush2.msra.mxu0 0.0
    %1379 = vmatprep.subr.mxu0 0.0
    %1380 = vmatpush2.msra.mxu0 0.0
    %1381 = vmatprep.subr.mxu0 0.0
    %1382 = vmatpush2.msra.mxu0 0.0
    %1383 = vmatprep.subr.mxu0 0.0
    %1384 = vmatpush2.msra.mxu0 0.0
    %1385 = vmatprep.subr.mxu0 0.0
    %1386 = vmatpush2.msra.mxu0 0.0
    %1387 = vmatprep.subr.mxu0 0.0
    %1388 = vmatpush2.msra.mxu0 0.0
    %1389 = vmatprep.subr.mxu0 0.0
    %1390 = vmatpush2.msra.mxu0 0.0
    %1391 = vmatprep.subr.mxu0 0.0
    %1392 = vmatpush2.msra.mxu0 0.0
    %1393 = vmatprep.subr.mxu0 0.0
    %1394 = vmatpush2.msra.mxu0 0.0
    %1395 = vmatprep.subr.mxu0 0.0
    %1396 = vmatpush2.msra.mxu0 0.0
    %1397 = vmatprep.subr.mxu0 0.0
    %1398 = vmatpush2.msra.mxu0 0.0
    %1399 = vmatprep.subr.mxu0 0.0
    %1400 = vmatpush2.msra.mxu0 0.0
    %1401 = vmatprep.subr.mxu0 0.0
    %1402 = vmatpush2.msra.mxu0 0.0
    %1403 = vmatprep.subr.mxu0 0.0
    %1404 = vmatpush2.msra.mxu0 0.0
    %1405 = vmatprep.subr.mxu0 0.0
    %1406 = vmatpush2.msra.mxu0 0.0
    %1407 = vmatprep.mubr.f32.mxu0 0.0
    %1408 = vmatmul.mubr.f32.gmra.mxu0 %v1341
    %v1409 = vpop.f32.mrf.mxu0
    %v1410 = vadd.f32 0.0, %v1409
    %v1411 = vpop.f32.mrf.mxu0
    %1412 = vdwg.mxu0
    %v1413 = vadd.f32 %v634, %v1410
    %v1414 = vxor.u32 %v1413, 2147483648
    %v1415 = vmul.f32 %v1414, 1.442695
    %v1416 = vpow.pop %v1415
    %v1417 = vadd.f32 %v1416, 1.0
    %v1418 = vrcp.pop %v1417
    %v1419 = vmul.f32 1.0, %v1418
    %v1420 = vtanh.pop %v1413
    %v1421 = vmul.f32 %v1419, %v1331
    %1423 = vrot.lane.b32.xlu0 %v1420, 64
    %v1424 = vpop.permute.xlu0 %1423
    %v1426 = vmul.f32 %v1419, %v1424
    %1428 = vrot.lane.b32.xlu0 %v1426, 32
    %v1429 = vpop.permute.xlu0 %1428
    %v1431 = vadd.f32 %v1421, %v1429
    %v1432 = vtanh.pop %v1431
    %1434 = vrot.lane.b32.xlu0 %v1432, 64
    %v1435 = vpop.permute.xlu0 %1434
    %v1437 = vmul.f32 %v1419, %v1435
    %v1438 = vld [vmem:[#allocation4 + $0x286] sm:$0xff]
    %v1439 = vld [vmem:[#allocation4 + $0x28e] sm:$0xff]
    %v1440 = vld [vmem:[#allocation4 + $0x296] sm:$0xff]
    %v1441 = vld [vmem:[#allocation4 + $0x29e] sm:$0xff]
    %v1442 = vld [vmem:[#allocation4 + $0x2a6] sm:$0x1]
    %v1443 = vlaneseq
    %v1444 = vshrl.u32 %v1443, 7
    %v1445 = vsub.s32 0, %v1444
    %v1446 = vrot.slane %v1442, %v1445
    %1448 = vrot.lane.b32.xlu0 %v1437, 32
    %v1449 = vpop.permute.xlu0 %1448
    %v1450 = vsel %vm639, %v1449, 0
    %1452 = vmatprep.subr.mxu0 0.0
    %1453 = vmatpush1.msra.mxu0 0.0
    %1454 = vmatprep.subr.mxu0 0.0
    %1455 = vmatpush1.msra.mxu0 0.0
    %1456 = vmatprep.subr.mxu0 0.0
    %1457 = vmatpush1.msra.mxu0 0.0
    %1458 = vmatprep.subr.mxu0 0.0
    %1459 = vmatpush1.msra.mxu0 0.0
    %1460 = vmatprep.subr.mxu0 0.0
    %1461 = vmatpush1.msra.mxu0 0.0
    %1462 = vmatprep.subr.mxu0 0.0
    %1463 = vmatpush1.msra.mxu0 0.0
    %1464 = vmatprep.subr.mxu0 0.0
    %1465 = vmatpush1.msra.mxu0 0.0
    %1466 = vmatprep.subr.mxu0 0.0
    %1467 = vmatpush1.msra.mxu0 0.0
    %1468 = vmatprep.subr.mxu0 0.0
    %1469 = vmatpush1.msra.mxu0 0.0
    %1470 = vmatprep.subr.mxu0 0.0
    %1471 = vmatpush1.msra.mxu0 0.0
    %1472 = vmatprep.subr.mxu0 0.0
    %1473 = vmatpush1.msra.mxu0 0.0
    %1474 = vmatprep.subr.mxu0 0.0
    %1475 = vmatpush1.msra.mxu0 0.0
    %1476 = vmatprep.subr.mxu0 0.0
    %1477 = vmatpush1.msra.mxu0 %v1441
    %1478 = vmatprep.subr.mxu0 0.0
    %1479 = vmatpush1.msra.mxu0 %v1440
    %1480 = vmatprep.subr.mxu0 0.0
    %1481 = vmatpush1.msra.mxu0 %v1439
    %1482 = vmatprep.subr.mxu0 0.0
    %1483 = vmatpush1.msra.mxu0 %v1438
    %1484 = vmatprep.subr.mxu0 0.0
    %1485 = vmatpush2.msra.mxu0 0.0
    %1486 = vmatprep.subr.mxu0 0.0
    %1487 = vmatpush2.msra.mxu0 0.0
    %1488 = vmatprep.subr.mxu0 0.0
    %1489 = vmatpush2.msra.mxu0 0.0
    %1490 = vmatprep.subr.mxu0 0.0
    %1491 = vmatpush2.msra.mxu0 0.0
    %1492 = vmatprep.subr.mxu0 0.0
    %1493 = vmatpush2.msra.mxu0 0.0
    %1494 = vmatprep.subr.mxu0 0.0
    %1495 = vmatpush2.msra.mxu0 0.0
    %1496 = vmatprep.subr.mxu0 0.0
    %1497 = vmatpush2.msra.mxu0 0.0
    %1498 = vmatprep.subr.mxu0 0.0
    %1499 = vmatpush2.msra.mxu0 0.0
    %1500 = vmatprep.subr.mxu0 0.0
    %1501 = vmatpush2.msra.mxu0 0.0
    %1502 = vmatprep.subr.mxu0 0.0
    %1503 = vmatpush2.msra.mxu0 0.0
    %1504 = vmatprep.subr.mxu0 0.0
    %1505 = vmatpush2.msra.mxu0 0.0
    %1506 = vmatprep.subr.mxu0 0.0
    %1507 = vmatpush2.msra.mxu0 0.0
    %1508 = vmatprep.subr.mxu0 0.0
    %1509 = vmatpush2.msra.mxu0 0.0
    %1510 = vmatprep.subr.mxu0 0.0
    %1511 = vmatpush2.msra.mxu0 0.0
    %1512 = vmatprep.subr.mxu0 0.0
    %1513 = vmatpush2.msra.mxu0 0.0
    %1514 = vmatprep.subr.mxu0 0.0
    %1515 = vmatpush2.msra.mxu0 0.0
    %1516 = vmatprep.mubr.f32.mxu0 0.0
    %1517 = vmatmul.mubr.f32.gmra.mxu0 %v1450
    %v1518 = vpop.f32.mrf.mxu0
    %v1519 = vadd.f32 %v1446, %v1518
    %v1520 = vpop.f32.mrf.mxu0
    %1521 = vdwg.mxu0
    %v1522 = vld [vmem:[#allocation4 + $0x2a7] sm:$0xff]
    %v1523 = vld [vmem:[#allocation4 + $0x2af] sm:$0xff]
    %v1524 = vld [vmem:[#allocation4 + $0x2b7] sm:$0xff]
    %v1525 = vld [vmem:[#allocation4 + $0x2bf] sm:$0xff]
    %v1526 = vld [vmem:[#allocation4 + $0x2c7] sm:$0xff]
    %v1527 = vld [vmem:[#allocation4 + $0x2cf] sm:$0xff]
    %v1528 = vld [vmem:[#allocation4 + $0x2d7] sm:$0xff]
    %v1529 = vld [vmem:[#allocation4 + $0x2df] sm:$0xff]
    %v1530 = vrot.slane %v1437, 2
    %1531 = vrot.lane.b32.xlu0 %v1530, 32
    %v1532 = vpop.permute.xlu0 %1531
    %v1533 = vsel %vm639, %v1532, 0
    %1535 = vmatprep.subr.mxu0 0.0
    %1536 = vmatpush1.msra.mxu0 0.0
    %1537 = vmatprep.subr.mxu0 0.0
    %1538 = vmatpush1.msra.mxu0 0.0
    %1539 = vmatprep.subr.mxu0 0.0
    %1540 = vmatpush1.msra.mxu0 0.0
    %1541 = vmatprep.subr.mxu0 0.0
    %1542 = vmatpush1.msra.mxu0 0.0
    %1543 = vmatprep.subr.mxu0 0.0
    %1544 = vmatpush1.msra.mxu0 0.0
    %1545 = vmatprep.subr.mxu0 0.0
    %1546 = vmatpush1.msra.mxu0 0.0
    %1547 = vmatprep.subr.mxu0 0.0
    %1548 = vmatpush1.msra.mxu0 0.0
    %1549 = vmatprep.subr.mxu0 0.0
    %1550 = vmatpush1.msra.mxu0 0.0
    %1551 = vmatprep.subr.mxu0 0.0
    %1552 = vmatpush1.msra.mxu0 0.0
    %1553 = vmatprep.subr.mxu0 0.0
    %1554 = vmatpush1.msra.mxu0 0.0
    %1555 = vmatprep.subr.mxu0 0.0
    %1556 = vmatpush1.msra.mxu0 0.0
    %1557 = vmatprep.subr.mxu0 0.0
    %1558 = vmatpush1.msra.mxu0 0.0
    %1559 = vmatprep.subr.mxu0 0.0
    %1560 = vmatpush1.msra.mxu0 %v1529
    %1561 = vmatprep.subr.mxu0 0.0
    %1562 = vmatpush1.msra.mxu0 %v1528
    %1563 = vmatprep.subr.mxu0 0.0
    %1564 = vmatpush1.msra.mxu0 %v1527
    %1565 = vmatprep.subr.mxu0 0.0
    %1566 = vmatpush1.msra.mxu0 %v1526
    %1567 = vmatprep.subr.mxu0 0.0
    %1568 = vmatpush2.msra.mxu0 0.0
    %1569 = vmatprep.subr.mxu0 0.0
    %1570 = vmatpush2.msra.mxu0 0.0
    %1571 = vmatprep.subr.mxu0 0.0
    %1572 = vmatpush2.msra.mxu0 0.0
    %1573 = vmatprep.subr.mxu0 0.0
    %1574 = vmatpush2.msra.mxu0 0.0
    %1575 = vmatprep.subr.mxu0 0.0
    %1576 = vmatpush2.msra.mxu0 0.0
    %1577 = vmatprep.subr.mxu0 0.0
    %1578 = vmatpush2.msra.mxu0 0.0
    %1579 = vmatprep.subr.mxu0 0.0
    %1580 = vmatpush2.msra.mxu0 0.0
    %1581 = vmatprep.subr.mxu0 0.0
    %1582 = vmatpush2.msra.mxu0 0.0
    %1583 = vmatprep.subr.mxu0 0.0
    %1584 = vmatpush2.msra.mxu0 0.0
    %1585 = vmatprep.subr.mxu0 0.0
    %1586 = vmatpush2.msra.mxu0 0.0
    %1587 = vmatprep.subr.mxu0 0.0
    %1588 = vmatpush2.msra.mxu0 0.0
    %1589 = vmatprep.subr.mxu0 0.0
    %1590 = vmatpush2.msra.mxu0 0.0
    %1591 = vmatprep.subr.mxu0 0.0
    %1592 = vmatpush2.msra.mxu0 0.0
    %1593 = vmatprep.subr.mxu0 0.0
    %1594 = vmatpush2.msra.mxu0 0.0
    %1595 = vmatprep.subr.mxu0 0.0
    %1596 = vmatpush2.msra.mxu0 0.0
    %1597 = vmatprep.subr.mxu0 0.0
    %1598 = vmatpush2.msra.mxu0 0.0
    %1599 = vmatprep.mubr.f32.mxu0 0.0
    %1600 = vmatmul.mubr.f32.gmra.mxu0 %v1533
    %v1601 = vpop.f32.mrf.mxu0
    %v1602 = vadd.f32 0.0, %v1601
    %v1603 = vpop.f32.mrf.mxu0
    %1604 = vdwg.mxu0
    %1605 = vmatprep.subr.mxu0 0.0
    %1606 = vmatpush1.msra.mxu0 0.0
    %1607 = vmatprep.subr.mxu0 0.0
    %1608 = vmatpush1.msra.mxu0 0.0
    %1609 = vmatprep.subr.mxu0 0.0
    %1610 = vmatpush1.msra.mxu0 0.0
    %1611 = vmatprep.subr.mxu0 0.0
    %1612 = vmatpush1.msra.mxu0 0.0
    %1613 = vmatprep.subr.mxu0 0.0
    %1614 = vmatpush1.msra.mxu0 0.0
    %1615 = vmatprep.subr.mxu0 0.0
    %1616 = vmatpush1.msra.mxu0 0.0
    %1617 = vmatprep.subr.mxu0 0.0
    %1618 = vmatpush1.msra.mxu0 0.0
    %1619 = vmatprep.subr.mxu0 0.0
    %1620 = vmatpush1.msra.mxu0 0.0
    %1621 = vmatprep.subr.mxu0 0.0
    %1622 = vmatpush1.msra.mxu0 0.0
    %1623 = vmatprep.subr.mxu0 0.0
    %1624 = vmatpush1.msra.mxu0 0.0
    %1625 = vmatprep.subr.mxu0 0.0
    %1626 = vmatpush1.msra.mxu0 0.0
    %1627 = vmatprep.subr.mxu0 0.0
    %1628 = vmatpush1.msra.mxu0 0.0
    %1629 = vmatprep.subr.mxu0 0.0
    %1630 = vmatpush1.msra.mxu0 %v1525
    %1631 = vmatprep.subr.mxu0 0.0
    %1632 = vmatpush1.msra.mxu0 %v1524
    %1633 = vmatprep.subr.mxu0 0.0
    %1634 = vmatpush1.msra.mxu0 %v1523
    %1635 = vmatprep.subr.mxu0 0.0
    %1636 = vmatpush1.msra.mxu0 %v1522
    %1637 = vmatprep.subr.mxu0 0.0
    %1638 = vmatpush2.msra.mxu0 0.0
    %1639 = vmatprep.subr.mxu0 0.0
    %1640 = vmatpush2.msra.mxu0 0.0
    %1641 = vmatprep.subr.mxu0 0.0
    %1642 = vmatpush2.msra.mxu0 0.0
    %1643 = vmatprep.subr.mxu0 0.0
    %1644 = vmatpush2.msra.mxu0 0.0
    %1645 = vmatprep.subr.mxu0 0.0
    %1646 = vmatpush2.msra.mxu0 0.0
    %1647 = vmatprep.subr.mxu0 0.0
    %1648 = vmatpush2.msra.mxu0 0.0
    %1649 = vmatprep.subr.mxu0 0.0
    %1650 = vmatpush2.msra.mxu0 0.0
    %1651 = vmatprep.subr.mxu0 0.0
    %1652 = vmatpush2.msra.mxu0 0.0
    %1653 = vmatprep.subr.mxu0 0.0
    %1654 = vmatpush2.msra.mxu0 0.0
    %1655 = vmatprep.subr.mxu0 0.0
    %1656 = vmatpush2.msra.mxu0 0.0
    %1657 = vmatprep.subr.mxu0 0.0
    %1658 = vmatpush2.msra.mxu0 0.0
    %1659 = vmatprep.subr.mxu0 0.0
    %1660 = vmatpush2.msra.mxu0 0.0
    %1661 = vmatprep.subr.mxu0 0.0
    %1662 = vmatpush2.msra.mxu0 0.0
    %1663 = vmatprep.subr.mxu0 0.0
    %1664 = vmatpush2.msra.mxu0 0.0
    %1665 = vmatprep.subr.mxu0 0.0
    %1666 = vmatpush2.msra.mxu0 0.0
    %1667 = vmatprep.subr.mxu0 0.0
    %1668 = vmatpush2.msra.mxu0 0.0
    %1669 = vmatprep.mubr.f32.mxu0 0.0
    %1670 = vmatmul.mubr.f32.gmra.mxu0 %v1450
    %v1671 = vpop.f32.mrf.mxu0
    %v1672 = vadd.f32 %v1602, %v1671
    %v1673 = vpop.f32.mrf.mxu0
    %1674 = vdwg.mxu0
    %v1675 = vld [vmem:[#allocation4 + $0x2e7] sm:$0x1]
    %v1676 = vlaneseq
    %v1677 = vshrl.u32 %v1676, 7
    %v1678 = vsub.s32 0, %v1677
    %v1679 = vrot.slane %v1675, %v1678
    %v1680 = vadd.f32 %v1672, %v1679
    %v1682 = vrot.slane %v1680, 4
    %v1684 = vsel %vm84, %v1519, %v1682
    %vm1685 = vcmask 1045504
    %v1686 = vsel %vm1685, %v1684, 0.0
    %1687 = vst [vmem:[%s2] sm:$0xff] %v1686
    // Predicated region
    $region18: #{u_t_train_forward.1} parent=1 // pred_check
      _
    $region19: #{u_t_train_forward.1} parent=1 // pred_check_branch
      %1689 = sbr.rel (0) target = $region21
    $region20: #{u_t_train_forward.1} parent=1 // pred_region
      _
    $region21: #{u_t_train_forward.1} parent=1 // pred_fallthru
      _
    // Predicated region
    $region22: #{u_t_train_forward.1} parent=1 // pred_check
      _
    $region23: #{u_t_train_forward.1} parent=1 // pred_check_branch
      %1691 = sbr.rel (0) target = $region25
    $region24: #{u_t_train_forward.1} parent=1 // pred_region
      _
    $region25: #{u_t_train_forward.1} parent=1 // pred_fallthru
      _
    %1692 = vsyncpa [#allocation3], 1
    %1693 = vsyncpa [#allocation5], 1

</llo_original>
